<compile_context>
chip_gen: v5e
topology: v5e:2x2
jax: 0.10.0
libtpu: 0.0.40
codegen_flags: <defaults>
</compile_context>

<pallas_src>
import jax
import jax.numpy as jnp
from jax import lax
from jax.experimental import pallas as pl
from jax.experimental.pallas import tpu as pltpu


# ----------------------------------------------------------------------------
# Fused multi-layer ConvLSTM kernel (one batch element per grid step).
#
# Ref order: [x,  (wT_l, b_l) per layer,          # inputs
#             (h_l, c_l) per layer,               # outputs
#             (pad_l, col_l) per layer]           # VMEM scratch
#   x     : (1, Cin_0, H*W)
#   wT_l  : (4*Hd_l, K*K*Cin_l)        pre-transposed x-part of the conv weight
#   b_l   : (4*Hd_l, 1)
#   h_l   : (1, Hd_l, H*W)   out
#   c_l   : (1, Hd_l, H*W)   out
#   pad_l : (Cin_l, padl + H*W + pad*(W+1))   zero-padded flat feature scratch
#   col_l : (K*K*Cin_l, H*W)                  im2col scratch
# ----------------------------------------------------------------------------
def _make_fused_kernel(H, W, layer_cfg):
    HW = H * W
    num_layers = len(layer_cfg)

    def kernel(*refs):
        n_in = 1 + 2 * num_layers
        n_out = 2 * num_layers
        x_ref = refs[0]
        w_refs = [refs[1 + 2 * l] for l in range(num_layers)]
        b_refs = [refs[2 + 2 * l] for l in range(num_layers)]
        h_refs = [refs[n_in + 2 * l] for l in range(num_layers)]
        c_refs = [refs[n_in + 2 * l + 1] for l in range(num_layers)]
        pad_refs = [refs[n_in + n_out + 2 * l] for l in range(num_layers)]
        col_refs = [refs[n_in + n_out + 2 * l + 1] for l in range(num_layers)]

        # x-coordinate of every output pixel (hoisted; reused for the SAME-conv
        # column-validity masks of every layer).
        xpos = lax.broadcasted_iota(jnp.int32, (1, HW), 1) % W

        feat = x_ref[0].astype(jnp.float32)                   # (Cin_0, H*W)
        for l, (cin, hd, K, padl, _padw) in enumerate(layer_cfg):
            pad = K // 2
            pref = pad_refs[l]
            cref = col_refs[l]

            # Zero-padded flat copy of the layer input.  The left pad (padl,
            # lane-aligned) and right pad (pad*(W+1)) are large enough that every
            # tap window is a static in-bounds lane slice; row/array overflow in
            # the y direction reads zeros, x overflow is masked below.
            pref[...] = jnp.zeros_like(pref)
            pref[:, padl:padl + HW] = feat

            # Column-validity masks per horizontal tap offset (hoisted).
            xmask = {dx: (xpos + dx >= 0) & (xpos + dx < W)
                     for dx in range(-pad, pad + 1) if dx != 0}

            # Build im2col (K*K*cin, H*W): row (ky*K + kx)*cin + c.
            for ky in range(K):
                for kx in range(K):
                    dy, dx = ky - pad, kx - pad
                    start = padl + dy * W + dx
                    blk = pref[:, start:start + HW]           # (cin, H*W)
                    if dx != 0:
                        blk = jnp.where(xmask[dx], blk, 0.0)
                    t = ky * K + kx
                    cref[t * cin:(t + 1) * cin, :] = blk

            # Single MXU matmul: (4*hd, K*K*cin) @ (K*K*cin, H*W) -> (4*hd, H*W)
            acc = jnp.dot(w_refs[l][...], cref[...],
                          preferred_element_type=jnp.float32)
            acc = acc + b_refs[l][...]                        # (4*hd, 1) lane-broadcast

            # Gate order matches torch.split(combined_conv, hd): i, f, o, g.
            # The f-gate is skipped: hidden_state=None => c_prev == 0 => f*c_prev == 0.
            i_g = jax.nn.sigmoid(acc[0 * hd:1 * hd, :])
            o_g = jax.nn.sigmoid(acc[2 * hd:3 * hd, :])
            g_g = jnp.tanh(acc[3 * hd:4 * hd, :])
            c_next = i_g * g_g
            h_next = o_g * jnp.tanh(c_next)

            h_refs[l][0] = h_next.astype(h_refs[l].dtype)     # lane-dense store (H*W lanes)
            c_refs[l][0] = c_next.astype(c_refs[l].dtype)
            feat = h_next                                     # feeds next layer, stays on-chip

    return kernel


# ----------------------------------------------------------------------------
# ConvLSTM.forward semantics (hidden_state=None -> zero init,
# return_all_layers=True -> list of [h, c] per layer, NCHW at the boundary).
#   params: list of (w, b, hidden_dim); w is HWIO (K, K, cur_in + hd, 4*hd)
#           (PyTorch OIHW weight -> transpose(2, 3, 1, 0)); b is (4*hd,).
# ----------------------------------------------------------------------------
def convlstm_forward(params, x_nchw):
    B, C0, H, W = x_nchw.shape
    HW = H * W
    x3 = x_nchw.reshape(B, C0, HW)   # NCHW flattened == channels-on-sublanes / pixels-on-lanes

    layer_cfg = []                   # (cin, hd, K, padl, padw) per layer
    inputs = [x3]
    in_specs = [pl.BlockSpec((1, C0, HW), lambda bi: (bi, 0, 0))]
    out_shapes, out_specs, scratch_shapes = [], [], []

    cin = C0
    for (w, b, hd) in params:
        K = w.shape[0]
        assert K % 2 == 1, "reference module's padding=K//2 is SAME only for odd K"
        pad = K // 2
        padl = max(128, pad * (W + 1))          # lane-aligned left zero pad >= max tap shift
        padw = padl + HW + pad * (W + 1)

        # hidden_state=None => h0 == 0, so conv(cat([x, h0])) only needs the
        # x-part of the weight.  Slice + pre-transpose once here (no per-step
        # relayout/cast inside the kernel).
        w_x = jnp.asarray(w[:, :, :cin, :], jnp.float32)               # (K, K, cin, 4*hd)
        wT = w_x.reshape(K * K * cin, 4 * hd).T                        # (4*hd, K*K*cin)
        b2 = jnp.asarray(b, jnp.float32).reshape(4 * hd, 1)

        inputs += [wT, b2]
        in_specs += [pl.BlockSpec((4 * hd, K * K * cin), lambda bi: (0, 0)),
                     pl.BlockSpec((4 * hd, 1), lambda bi: (0, 0))]
        out_shapes += [jax.ShapeDtypeStruct((B, hd, HW), x_nchw.dtype)] * 2
        out_specs += [pl.BlockSpec((1, hd, HW), lambda bi: (bi, 0, 0))] * 2
        scratch_shapes += [pltpu.VMEM((cin, padw), jnp.float32),
                           pltpu.VMEM((K * K * cin, HW), jnp.float32)]
        layer_cfg.append((cin, hd, K, padl, padw))
        cin = hd

    kernel = _make_fused_kernel(H, W, layer_cfg)

    outs = pl.pallas_call(
        kernel,
        out_shape=tuple(out_shapes),
        grid=(B,),
        in_specs=in_specs,
        out_specs=tuple(out_specs),
        scratch_shapes=scratch_shapes,
        compiler_params=pltpu.CompilerParams(
            dimension_semantics=("parallel",)),
    )(*inputs)

    last_state_list = []
    for l, (_cin, hd, _K, _pl_, _pw) in enumerate(layer_cfg):
        h = outs[2 * l].reshape(B, hd, H, W)        # (B, C, H, W) — NCHW, just a reshape
        c = outs[2 * l + 1].reshape(B, hd, H, W)
        last_state_list.append([h, c])
    return last_state_list


# ----------------------------------------------------------------------------
# Pure-JAX reference (full conv on concat([x, zeros]) — ground-truth semantics).
# ----------------------------------------------------------------------------
def _ref_cell(x, h_cur, c_cur, w, b):
    combined = jnp.concatenate([x, h_cur], axis=-1)
    cc = lax.conv_general_dilated(
        combined, w, (1, 1), "SAME",
        dimension_numbers=("NHWC", "HWIO", "NHWC"),
        precision=lax.Precision.HIGHEST) + b.reshape(1, 1, 1, -1)
    Hd = h_cur.shape[-1]
    i = jax.nn.sigmoid(cc[..., 0 * Hd:1 * Hd])
    f = jax.nn.sigmoid(cc[..., 1 * Hd:2 * Hd])
    o = jax.nn.sigmoid(cc[..., 2 * Hd:3 * Hd])
    g = jnp.tanh(cc[..., 3 * Hd:4 * Hd])
    c_next = f * c_cur + i * g
    h_next = o * jnp.tanh(c_next)
    return h_next, c_next


def _ref_forward(params, x_nchw):
    x = jnp.transpose(x_nchw, (0, 2, 3, 1))
    B, H, W, _ = x.shape
    cur = x
    out = []
    for (w, b, hd) in params:
        h0 = jnp.zeros((B, H, W, hd), x.dtype)
        c0 = jnp.zeros((B, H, W, hd), x.dtype)
        h, c = _ref_cell(cur, h0, c0, w, b)
        cur = h
        out.append([jnp.transpose(h, (0, 3, 1, 2)),
                    jnp.transpose(c, (0, 3, 1, 2))])
    return out


if __name__ == "__main__":
    # Module config: ConvLSTM(input_dim=4, hidden_dim=[8, 8], kernel_size=3,
    #                         num_layers=2, bias=True, pretrain='')
    input_dim = 4
    hidden_dims = [8, 8]
    kernel_size = 3
    B, H, W = 2, 16, 16

    key = jax.random.PRNGKey(0)
    kx, kparams = jax.random.split(key)
    x = jax.random.normal(kx, (B, input_dim, H, W), jnp.float32)   # NCHW

    # Deterministic synthetic parameters (weight layout HWIO = K, K, cin+hd, 4*hd).
    params = []
    cur_in = input_dim
    for hd in hidden_dims:
        kparams, kw, kb = jax.random.split(kparams, 3)
        cin = cur_in + hd
        w = 0.1 * jax.random.normal(kw, (kernel_size, kernel_size, cin, 4 * hd),
                                    jnp.float32)
        b = 0.1 * jax.random.normal(kb, (4 * hd,), jnp.float32)
        params.append((w, b, hd))
        cur_in = hd

    out = convlstm_forward(params, x)
    out = jax.block_until_ready(out)

    ref = _ref_forward(params, x)
    for (h_k, c_k), (h_r, c_r) in zip(out, ref):
        assert h_k.shape == h_r.shape and c_k.shape == c_r.shape
        assert jnp.allclose(h_k, h_r, atol=1e-5, rtol=1e-5)
        assert jnp.allclose(c_k, c_r, atol=1e-5, rtol=1e-5)

    print("KERNEL_OK")
</pallas_src>

<mosaic_0001>
module attributes {stable_mosaic.version = 11 : i64} {
  func.func @kernel(%arg0: i32, %arg1: memref<1x4x256xf32, #tpu.memory_space<vmem>>, %arg2: memref<32x36xf32, #tpu.memory_space<vmem>>, %arg3: memref<32x1xf32, #tpu.memory_space<vmem>>, %arg4: memref<32x72xf32, #tpu.memory_space<vmem>>, %arg5: memref<32x1xf32, #tpu.memory_space<vmem>>, %arg6: memref<1x8x256xf32, #tpu.memory_space<vmem>>, %arg7: memref<1x8x256xf32, #tpu.memory_space<vmem>>, %arg8: memref<1x8x256xf32, #tpu.memory_space<vmem>>, %arg9: memref<1x8x256xf32, #tpu.memory_space<vmem>>, %arg10: memref<4x401xf32, #tpu.memory_space<vmem>>, %arg11: memref<36x256xf32, #tpu.memory_space<vmem>>, %arg12: memref<8x401xf32, #tpu.memory_space<vmem>>, %arg13: memref<72x256xf32, #tpu.memory_space<vmem>>) attributes {dimension_semantics = [#tpu.dimension_semantics<parallel>], iteration_bounds = array<i64: 2>, scalar_prefetch = 0 : i64, scratch_operands = 4 : i64, tpu.core_type = #tpu.core_type<tc>, window_params = [{transform_indices = @transform_0, window_bounds = array<i64: 1, 4, 256>}, {pipeline_mode = #tpu.pipeline_mode<synchronous>, transform_indices = @transform_1, window_bounds = array<i64: 32, 36>}, {pipeline_mode = #tpu.pipeline_mode<synchronous>, transform_indices = @transform_2, window_bounds = array<i64: 32, 1>}, {pipeline_mode = #tpu.pipeline_mode<synchronous>, transform_indices = @transform_3, window_bounds = array<i64: 32, 72>}, {pipeline_mode = #tpu.pipeline_mode<synchronous>, transform_indices = @transform_4, window_bounds = array<i64: 32, 1>}, {transform_indices = @transform_5, window_bounds = array<i64: 1, 8, 256>}, {transform_indices = @transform_6, window_bounds = array<i64: 1, 8, 256>}, {transform_indices = @transform_7, window_bounds = array<i64: 1, 8, 256>}, {transform_indices = @transform_8, window_bounds = array<i64: 1, 8, 256>}]} {
    %0 = tpu.iota {dimensions = array<i32: 1>} : vector<1x256xi32>
    %c16_i32 = arith.constant 16 : i32
    %c0_i32 = arith.constant 0 : i32
    %1 = arith.cmpi eq, %c16_i32, %c0_i32 : i32
    %c1_i32 = arith.constant 1 : i32
    %2 = arith.select %1, %c1_i32, %c16_i32 : i32
    %3 = vector.broadcast %2 : i32 to vector<1x256xi32>
    %4 = arith.remsi %0, %3 : vector<1x256xi32>
    %c0_i32_0 = arith.constant 0 : i32
    %5 = vector.broadcast %c0_i32_0 : i32 to vector<1x256xi32>
    %6 = arith.cmpi ne, %4, %5 : vector<1x256xi32>
    %c0_i32_1 = arith.constant 0 : i32
    %7 = vector.broadcast %c0_i32_1 : i32 to vector<1x256xi32>
    %8 = arith.cmpi slt, %4, %7 : vector<1x256xi32>
    %c0_i32_2 = arith.constant 0 : i32
    %9 = arith.cmpi slt, %2, %c0_i32_2 : i32
    %10 = vector.broadcast %9 : i1 to vector<1x256xi1>
    %11 = vector.broadcast %10 : vector<1x256xi1> to vector<1x256xi1>
    %12 = arith.xori %8, %11 : vector<1x256xi1>
    %13 = arith.andi %12, %6 : vector<1x256xi1>
    %14 = vector.broadcast %2 : i32 to vector<1x256xi32>
    %15 = arith.addi %4, %14 : vector<1x256xi32>
    %16 = arith.select %13, %15, %4 : vector<1x256xi1>, vector<1x256xi32>
    %c0 = arith.constant 0 : index
    %c0_3 = arith.constant 0 : index
    %c0_4 = arith.constant 0 : index
    %17 = vector.load %arg1[%c0, %c0_3, %c0_4] : memref<1x4x256xf32, #tpu.memory_space<vmem>>, vector<1x4x256xf32>
    %18 = vector.shape_cast %17 : vector<1x4x256xf32> to vector<4x256xf32>
    %cst = arith.constant 0.000000e+00 : f32
    %19 = vector.broadcast %cst : f32 to vector<4x401xf32>
    %c0_5 = arith.constant 0 : index
    %c0_6 = arith.constant 0 : index
    %20 = vector.load %arg10[%c0_5, %c0_6] : memref<4x401xf32, #tpu.memory_space<vmem>>, vector<4x401xf32>
    tpu.vector_store %arg10[%c0_5, %c0_6], %19 {strides = array<i32>} : memref<4x401xf32, #tpu.memory_space<vmem>>, vector<4x401xf32>,
    %c0_7 = arith.constant 0 : index
    %c128 = arith.constant 128 : index
    %21 = vector.load %arg10[%c0_7, %c128] : memref<4x401xf32, #tpu.memory_space<vmem>>, vector<4x256xf32>
    tpu.vector_store %arg10[%c0_7, %c128], %18 {strides = array<i32>} : memref<4x401xf32, #tpu.memory_space<vmem>>, vector<4x256xf32>,
    %c-1_i32 = arith.constant -1 : i32
    %22 = vector.broadcast %c-1_i32 : i32 to vector<1x256xi32>
    %23 = arith.addi %16, %22 : vector<1x256xi32>
    %c0_i32_8 = arith.constant 0 : i32
    %24 = vector.broadcast %c0_i32_8 : i32 to vector<1x256xi32>
    %25 = arith.cmpi sge, %23, %24 : vector<1x256xi32>
    %c-1_i32_9 = arith.constant -1 : i32
    %26 = vector.broadcast %c-1_i32_9 : i32 to vector<1x256xi32>
    %27 = arith.addi %16, %26 : vector<1x256xi32>
    %c16_i32_10 = arith.constant 16 : i32
    %28 = vector.broadcast %c16_i32_10 : i32 to vector<1x256xi32>
    %29 = arith.cmpi slt, %27, %28 : vector<1x256xi32>
    %30 = arith.andi %25, %29 : vector<1x256xi1>
    %c1_i32_11 = arith.constant 1 : i32
    %31 = vector.broadcast %c1_i32_11 : i32 to vector<1x256xi32>
    %32 = arith.addi %16, %31 : vector<1x256xi32>
    %c0_i32_12 = arith.constant 0 : i32
    %33 = vector.broadcast %c0_i32_12 : i32 to vector<1x256xi32>
    %34 = arith.cmpi sge, %32, %33 : vector<1x256xi32>
    %c1_i32_13 = arith.constant 1 : i32
    %35 = vector.broadcast %c1_i32_13 : i32 to vector<1x256xi32>
    %36 = arith.addi %16, %35 : vector<1x256xi32>
    %c16_i32_14 = arith.constant 16 : i32
    %37 = vector.broadcast %c16_i32_14 : i32 to vector<1x256xi32>
    %38 = arith.cmpi slt, %36, %37 : vector<1x256xi32>
    %39 = arith.andi %34, %38 : vector<1x256xi1>
    %c0_15 = arith.constant 0 : index
    %c111 = arith.constant 111 : index
    %40 = vector.load %arg10[%c0_15, %c111] : memref<4x401xf32, #tpu.memory_space<vmem>>, vector<4x256xf32>
    %cst_16 = arith.constant 0.000000e+00 : f32
    %41 = vector.shape_cast %30 : vector<1x256xi1> to vector<1x256xi1>
    %42 = vector.broadcast %41 : vector<1x256xi1> to vector<4x256xi1>
    %43 = vector.broadcast %cst_16 : f32 to vector<4x256xf32>
    %44 = arith.select %42, %40, %43 : vector<4x256xi1>, vector<4x256xf32>
    %c0_17 = arith.constant 0 : index
    %c0_18 = arith.constant 0 : index
    %45 = vector.load %arg11[%c0_17, %c0_18] : memref<36x256xf32, #tpu.memory_space<vmem>>, vector<4x256xf32>
    tpu.vector_store %arg11[%c0_17, %c0_18], %44 {strides = array<i32>} : memref<36x256xf32, #tpu.memory_space<vmem>>, vector<4x256xf32>,
    %c0_19 = arith.constant 0 : index
    %c112 = arith.constant 112 : index
    %46 = vector.load %arg10[%c0_19, %c112] : memref<4x401xf32, #tpu.memory_space<vmem>>, vector<4x256xf32>
    %c4 = arith.constant 4 : index
    %c0_20 = arith.constant 0 : index
    %47 = vector.load %arg11[%c4, %c0_20] : memref<36x256xf32, #tpu.memory_space<vmem>>, vector<4x256xf32>
    tpu.vector_store %arg11[%c4, %c0_20], %46 {strides = array<i32>} : memref<36x256xf32, #tpu.memory_space<vmem>>, vector<4x256xf32>,
    %c0_21 = arith.constant 0 : index
    %c113 = arith.constant 113 : index
    %48 = vector.load %arg10[%c0_21, %c113] : memref<4x401xf32, #tpu.memory_space<vmem>>, vector<4x256xf32>
    %cst_22 = arith.constant 0.000000e+00 : f32
    %49 = vector.shape_cast %39 : vector<1x256xi1> to vector<1x256xi1>
    %50 = vector.broadcast %49 : vector<1x256xi1> to vector<4x256xi1>
    %51 = vector.broadcast %cst_22 : f32 to vector<4x256xf32>
    %52 = arith.select %50, %48, %51 : vector<4x256xi1>, vector<4x256xf32>
    %c8 = arith.constant 8 : index
    %c0_23 = arith.constant 0 : index
    %53 = vector.load %arg11[%c8, %c0_23] : memref<36x256xf32, #tpu.memory_space<vmem>>, vector<4x256xf32>
    tpu.vector_store %arg11[%c8, %c0_23], %52 {strides = array<i32>} : memref<36x256xf32, #tpu.memory_space<vmem>>, vector<4x256xf32>,
    %c0_24 = arith.constant 0 : index
    %c127 = arith.constant 127 : index
    %54 = vector.load %arg10[%c0_24, %c127] : memref<4x401xf32, #tpu.memory_space<vmem>>, vector<4x256xf32>
    %cst_25 = arith.constant 0.000000e+00 : f32
    %55 = vector.shape_cast %30 : vector<1x256xi1> to vector<1x256xi1>
    %56 = vector.broadcast %55 : vector<1x256xi1> to vector<4x256xi1>
    %57 = vector.broadcast %cst_25 : f32 to vector<4x256xf32>
    %58 = arith.select %56, %54, %57 : vector<4x256xi1>, vector<4x256xf32>
    %c12 = arith.constant 12 : index
    %c0_26 = arith.constant 0 : index
    %59 = vector.load %arg11[%c12, %c0_26] : memref<36x256xf32, #tpu.memory_space<vmem>>, vector<4x256xf32>
    tpu.vector_store %arg11[%c12, %c0_26], %58 {strides = array<i32>} : memref<36x256xf32, #tpu.memory_space<vmem>>, vector<4x256xf32>,
    %c0_27 = arith.constant 0 : index
    %c128_28 = arith.constant 128 : index
    %60 = vector.load %arg10[%c0_27, %c128_28] : memref<4x401xf32, #tpu.memory_space<vmem>>, vector<4x256xf32>
    %c16 = arith.constant 16 : index
    %c0_29 = arith.constant 0 : index
    %61 = vector.load %arg11[%c16, %c0_29] : memref<36x256xf32, #tpu.memory_space<vmem>>, vector<4x256xf32>
    tpu.vector_store %arg11[%c16, %c0_29], %60 {strides = array<i32>} : memref<36x256xf32, #tpu.memory_space<vmem>>, vector<4x256xf32>,
    %c0_30 = arith.constant 0 : index
    %c129 = arith.constant 129 : index
    %62 = vector.load %arg10[%c0_30, %c129] : memref<4x401xf32, #tpu.memory_space<vmem>>, vector<4x256xf32>
    %cst_31 = arith.constant 0.000000e+00 : f32
    %63 = vector.shape_cast %39 : vector<1x256xi1> to vector<1x256xi1>
    %64 = vector.broadcast %63 : vector<1x256xi1> to vector<4x256xi1>
    %65 = vector.broadcast %cst_31 : f32 to vector<4x256xf32>
    %66 = arith.select %64, %62, %65 : vector<4x256xi1>, vector<4x256xf32>
    %c20 = arith.constant 20 : index
    %c0_32 = arith.constant 0 : index
    %67 = vector.load %arg11[%c20, %c0_32] : memref<36x256xf32, #tpu.memory_space<vmem>>, vector<4x256xf32>
    tpu.vector_store %arg11[%c20, %c0_32], %66 {strides = array<i32>} : memref<36x256xf32, #tpu.memory_space<vmem>>, vector<4x256xf32>,
    %c0_33 = arith.constant 0 : index
    %c143 = arith.constant 143 : index
    %68 = vector.load %arg10[%c0_33, %c143] : memref<4x401xf32, #tpu.memory_space<vmem>>, vector<4x256xf32>
    %cst_34 = arith.constant 0.000000e+00 : f32
    %69 = vector.shape_cast %30 : vector<1x256xi1> to vector<1x256xi1>
    %70 = vector.broadcast %69 : vector<1x256xi1> to vector<4x256xi1>
    %71 = vector.broadcast %cst_34 : f32 to vector<4x256xf32>
    %72 = arith.select %70, %68, %71 : vector<4x256xi1>, vector<4x256xf32>
    %c24 = arith.constant 24 : index
    %c0_35 = arith.constant 0 : index
    %73 = vector.load %arg11[%c24, %c0_35] : memref<36x256xf32, #tpu.memory_space<vmem>>, vector<4x256xf32>
    tpu.vector_store %arg11[%c24, %c0_35], %72 {strides = array<i32>} : memref<36x256xf32, #tpu.memory_space<vmem>>, vector<4x256xf32>,
    %c0_36 = arith.constant 0 : index
    %c144 = arith.constant 144 : index
    %74 = vector.load %arg10[%c0_36, %c144] : memref<4x401xf32, #tpu.memory_space<vmem>>, vector<4x256xf32>
    %c28 = arith.constant 28 : index
    %c0_37 = arith.constant 0 : index
    %75 = vector.load %arg11[%c28, %c0_37] : memref<36x256xf32, #tpu.memory_space<vmem>>, vector<4x256xf32>
    tpu.vector_store %arg11[%c28, %c0_37], %74 {strides = array<i32>} : memref<36x256xf32, #tpu.memory_space<vmem>>, vector<4x256xf32>,
    %c0_38 = arith.constant 0 : index
    %c145 = arith.constant 145 : index
    %76 = vector.load %arg10[%c0_38, %c145] : memref<4x401xf32, #tpu.memory_space<vmem>>, vector<4x256xf32>
    %cst_39 = arith.constant 0.000000e+00 : f32
    %77 = vector.shape_cast %39 : vector<1x256xi1> to vector<1x256xi1>
    %78 = vector.broadcast %77 : vector<1x256xi1> to vector<4x256xi1>
    %79 = vector.broadcast %cst_39 : f32 to vector<4x256xf32>
    %80 = arith.select %78, %76, %79 : vector<4x256xi1>, vector<4x256xf32>
    %c32 = arith.constant 32 : index
    %c0_40 = arith.constant 0 : index
    %81 = vector.load %arg11[%c32, %c0_40] : memref<36x256xf32, #tpu.memory_space<vmem>>, vector<4x256xf32>
    tpu.vector_store %arg11[%c32, %c0_40], %80 {strides = array<i32>} : memref<36x256xf32, #tpu.memory_space<vmem>>, vector<4x256xf32>,
    %c0_41 = arith.constant 0 : index
    %c0_42 = arith.constant 0 : index
    %82 = vector.load %arg2[%c0_41, %c0_42] : memref<32x36xf32, #tpu.memory_space<vmem>>, vector<32x36xf32>
    %c0_43 = arith.constant 0 : index
    %c0_44 = arith.constant 0 : index
    %83 = vector.load %arg11[%c0_43, %c0_44] : memref<36x256xf32, #tpu.memory_space<vmem>>, vector<36x256xf32>
    %cst_45 = arith.constant dense<0.000000e+00> : vector<32x256xf32>
    %84 = tpu.matmul %82, %83, %cst_45 {dimension_numbers = #tpu.dot_dimension_numbers<[1], [0], [0], [1], [0, 0, 1, 1], [], []>} : vector<32x36xf32>, vector<36x256xf32>, vector<32x256xf32> -> vector<32x256xf32>
    %c0_46 = arith.constant 0 : index
    %c0_47 = arith.constant 0 : index
    %85 = vector.load %arg3[%c0_46, %c0_47] : memref<32x1xf32, #tpu.memory_space<vmem>>, vector<32x1xf32>
    %86 = vector.broadcast %85 : vector<32x1xf32> to vector<32x256xf32>
    %87 = arith.addf %84, %86 : vector<32x256xf32>
    %88 = vector.extract_strided_slice %87 {offsets = [0, 0], sizes = [8, 256], strides = [1, 1]} : vector<32x256xf32> to vector<8x256xf32>
    %89 = arith.negf %88 : vector<8x256xf32>
    %90 = math.exp %89 : vector<8x256xf32>
    %cst_48 = arith.constant 1.000000e+00 : f32
    %91 = vector.broadcast %cst_48 : f32 to vector<8x256xf32>
    %92 = arith.addf %91, %90 : vector<8x256xf32>
    %93 = arith.divf %91, %92 : vector<8x256xf32>
    %94 = vector.extract_strided_slice %87 {offsets = [16, 0], sizes = [8, 256], strides = [1, 1]} : vector<32x256xf32> to vector<8x256xf32>
    %95 = arith.negf %94 : vector<8x256xf32>
    %96 = math.exp %95 : vector<8x256xf32>
    %cst_49 = arith.constant 1.000000e+00 : f32
    %97 = vector.broadcast %cst_49 : f32 to vector<8x256xf32>
    %98 = arith.addf %97, %96 : vector<8x256xf32>
    %99 = arith.divf %97, %98 : vector<8x256xf32>
    %100 = vector.extract_strided_slice %87 {offsets = [24, 0], sizes = [8, 256], strides = [1, 1]} : vector<32x256xf32> to vector<8x256xf32>
    %101 = math.tanh %100 : vector<8x256xf32>
    %102 = arith.mulf %93, %101 : vector<8x256xf32>
    %103 = math.tanh %102 : vector<8x256xf32>
    %104 = arith.mulf %99, %103 : vector<8x256xf32>
    %c0_50 = arith.constant 0 : index
    %c0_51 = arith.constant 0 : index
    %c0_52 = arith.constant 0 : index
    %105 = vector.load %arg6[%c0_50, %c0_51, %c0_52] : memref<1x8x256xf32, #tpu.memory_space<vmem>>, vector<1x8x256xf32>
    %106 = vector.shape_cast %105 : vector<1x8x256xf32> to vector<8x256xf32>
    %107 = vector.shape_cast %104 : vector<8x256xf32> to vector<1x8x256xf32>
    tpu.vector_store %arg6[%c0_50, %c0_51, %c0_52], %107 {strides = array<i32>} : memref<1x8x256xf32, #tpu.memory_space<vmem>>, vector<1x8x256xf32>,
    %c0_53 = arith.constant 0 : index
    %c0_54 = arith.constant 0 : index
    %c0_55 = arith.constant 0 : index
    %108 = vector.load %arg7[%c0_53, %c0_54, %c0_55] : memref<1x8x256xf32, #tpu.memory_space<vmem>>, vector<1x8x256xf32>
    %109 = vector.shape_cast %108 : vector<1x8x256xf32> to vector<8x256xf32>
    %110 = vector.shape_cast %102 : vector<8x256xf32> to vector<1x8x256xf32>
    tpu.vector_store %arg7[%c0_53, %c0_54, %c0_55], %110 {strides = array<i32>} : memref<1x8x256xf32, #tpu.memory_space<vmem>>, vector<1x8x256xf32>,
    %cst_56 = arith.constant 0.000000e+00 : f32
    %111 = vector.broadcast %cst_56 : f32 to vector<8x401xf32>
    %c0_57 = arith.constant 0 : index
    %c0_58 = arith.constant 0 : index
    %112 = vector.load %arg12[%c0_57, %c0_58] : memref<8x401xf32, #tpu.memory_space<vmem>>, vector<8x401xf32>
    tpu.vector_store %arg12[%c0_57, %c0_58], %111 {strides = array<i32>} : memref<8x401xf32, #tpu.memory_space<vmem>>, vector<8x401xf32>,
    %c0_59 = arith.constant 0 : index
    %c128_60 = arith.constant 128 : index
    %113 = vector.load %arg12[%c0_59, %c128_60] : memref<8x401xf32, #tpu.memory_space<vmem>>, vector<8x256xf32>
    tpu.vector_store %arg12[%c0_59, %c128_60], %104 {strides = array<i32>} : memref<8x401xf32, #tpu.memory_space<vmem>>, vector<8x256xf32>,
    %c-1_i32_61 = arith.constant -1 : i32
    %114 = vector.broadcast %c-1_i32_61 : i32 to vector<1x256xi32>
    %115 = arith.addi %16, %114 : vector<1x256xi32>
    %c0_i32_62 = arith.constant 0 : i32
    %116 = vector.broadcast %c0_i32_62 : i32 to vector<1x256xi32>
    %117 = arith.cmpi sge, %115, %116 : vector<1x256xi32>
    %c-1_i32_63 = arith.constant -1 : i32
    %118 = vector.broadcast %c-1_i32_63 : i32 to vector<1x256xi32>
    %119 = arith.addi %16, %118 : vector<1x256xi32>
    %c16_i32_64 = arith.constant 16 : i32
    %120 = vector.broadcast %c16_i32_64 : i32 to vector<1x256xi32>
    %121 = arith.cmpi slt, %119, %120 : vector<1x256xi32>
    %122 = arith.andi %117, %121 : vector<1x256xi1>
    %c1_i32_65 = arith.constant 1 : i32
    %123 = vector.broadcast %c1_i32_65 : i32 to vector<1x256xi32>
    %124 = arith.addi %16, %123 : vector<1x256xi32>
    %c0_i32_66 = arith.constant 0 : i32
    %125 = vector.broadcast %c0_i32_66 : i32 to vector<1x256xi32>
    %126 = arith.cmpi sge, %124, %125 : vector<1x256xi32>
    %c1_i32_67 = arith.constant 1 : i32
    %127 = vector.broadcast %c1_i32_67 : i32 to vector<1x256xi32>
    %128 = arith.addi %16, %127 : vector<1x256xi32>
    %c16_i32_68 = arith.constant 16 : i32
    %129 = vector.broadcast %c16_i32_68 : i32 to vector<1x256xi32>
    %130 = arith.cmpi slt, %128, %129 : vector<1x256xi32>
    %131 = arith.andi %126, %130 : vector<1x256xi1>
    %c0_69 = arith.constant 0 : index
    %c111_70 = arith.constant 111 : index
    %132 = vector.load %arg12[%c0_69, %c111_70] : memref<8x401xf32, #tpu.memory_space<vmem>>, vector<8x256xf32>
    %cst_71 = arith.constant 0.000000e+00 : f32
    %133 = vector.shape_cast %122 : vector<1x256xi1> to vector<1x256xi1>
    %134 = vector.broadcast %133 : vector<1x256xi1> to vector<8x256xi1>
    %135 = vector.broadcast %cst_71 : f32 to vector<8x256xf32>
    %136 = arith.select %134, %132, %135 : vector<8x256xi1>, vector<8x256xf32>
    %c0_72 = arith.constant 0 : index
    %c0_73 = arith.constant 0 : index
    %137 = vector.load %arg13[%c0_72, %c0_73] : memref<72x256xf32, #tpu.memory_space<vmem>>, vector<8x256xf32>
    tpu.vector_store %arg13[%c0_72, %c0_73], %136 {strides = array<i32>} : memref<72x256xf32, #tpu.memory_space<vmem>>, vector<8x256xf32>,
    %c0_74 = arith.constant 0 : index
    %c112_75 = arith.constant 112 : index
    %138 = vector.load %arg12[%c0_74, %c112_75] : memref<8x401xf32, #tpu.memory_space<vmem>>, vector<8x256xf32>
    %c8_76 = arith.constant 8 : index
    %c0_77 = arith.constant 0 : index
    %139 = vector.load %arg13[%c8_76, %c0_77] : memref<72x256xf32, #tpu.memory_space<vmem>>, vector<8x256xf32>
    tpu.vector_store %arg13[%c8_76, %c0_77], %138 {strides = array<i32>} : memref<72x256xf32, #tpu.memory_space<vmem>>, vector<8x256xf32>,
    %c0_78 = arith.constant 0 : index
    %c113_79 = arith.constant 113 : index
    %140 = vector.load %arg12[%c0_78, %c113_79] : memref<8x401xf32, #tpu.memory_space<vmem>>, vector<8x256xf32>
    %cst_80 = arith.constant 0.000000e+00 : f32
    %141 = vector.shape_cast %131 : vector<1x256xi1> to vector<1x256xi1>
    %142 = vector.broadcast %141 : vector<1x256xi1> to vector<8x256xi1>
    %143 = vector.broadcast %cst_80 : f32 to vector<8x256xf32>
    %144 = arith.select %142, %140, %143 : vector<8x256xi1>, vector<8x256xf32>
    %c16_81 = arith.constant 16 : index
    %c0_82 = arith.constant 0 : index
    %145 = vector.load %arg13[%c16_81, %c0_82] : memref<72x256xf32, #tpu.memory_space<vmem>>, vector<8x256xf32>
    tpu.vector_store %arg13[%c16_81, %c0_82], %144 {strides = array<i32>} : memref<72x256xf32, #tpu.memory_space<vmem>>, vector<8x256xf32>,
    %c0_83 = arith.constant 0 : index
    %c127_84 = arith.constant 127 : index
    %146 = vector.load %arg12[%c0_83, %c127_84] : memref<8x401xf32, #tpu.memory_space<vmem>>, vector<8x256xf32>
    %cst_85 = arith.constant 0.000000e+00 : f32
    %147 = vector.shape_cast %122 : vector<1x256xi1> to vector<1x256xi1>
    %148 = vector.broadcast %147 : vector<1x256xi1> to vector<8x256xi1>
    %149 = vector.broadcast %cst_85 : f32 to vector<8x256xf32>
    %150 = arith.select %148, %146, %149 : vector<8x256xi1>, vector<8x256xf32>
    %c24_86 = arith.constant 24 : index
    %c0_87 = arith.constant 0 : index
    %151 = vector.load %arg13[%c24_86, %c0_87] : memref<72x256xf32, #tpu.memory_space<vmem>>, vector<8x256xf32>
    tpu.vector_store %arg13[%c24_86, %c0_87], %150 {strides = array<i32>} : memref<72x256xf32, #tpu.memory_space<vmem>>, vector<8x256xf32>,
    %c0_88 = arith.constant 0 : index
    %c128_89 = arith.constant 128 : index
    %152 = vector.load %arg12[%c0_88, %c128_89] : memref<8x401xf32, #tpu.memory_space<vmem>>, vector<8x256xf32>
    %c32_90 = arith.constant 32 : index
    %c0_91 = arith.constant 0 : index
    %153 = vector.load %arg13[%c32_90, %c0_91] : memref<72x256xf32, #tpu.memory_space<vmem>>, vector<8x256xf32>
    tpu.vector_store %arg13[%c32_90, %c0_91], %152 {strides = array<i32>} : memref<72x256xf32, #tpu.memory_space<vmem>>, vector<8x256xf32>,
    %c0_92 = arith.constant 0 : index
    %c129_93 = arith.constant 129 : index
    %154 = vector.load %arg12[%c0_92, %c129_93] : memref<8x401xf32, #tpu.memory_space<vmem>>, vector<8x256xf32>
    %cst_94 = arith.constant 0.000000e+00 : f32
    %155 = vector.shape_cast %131 : vector<1x256xi1> to vector<1x256xi1>
    %156 = vector.broadcast %155 : vector<1x256xi1> to vector<8x256xi1>
    %157 = vector.broadcast %cst_94 : f32 to vector<8x256xf32>
    %158 = arith.select %156, %154, %157 : vector<8x256xi1>, vector<8x256xf32>
    %c40 = arith.constant 40 : index
    %c0_95 = arith.constant 0 : index
    %159 = vector.load %arg13[%c40, %c0_95] : memref<72x256xf32, #tpu.memory_space<vmem>>, vector<8x256xf32>
    tpu.vector_store %arg13[%c40, %c0_95], %158 {strides = array<i32>} : memref<72x256xf32, #tpu.memory_space<vmem>>, vector<8x256xf32>,
    %c0_96 = arith.constant 0 : index
    %c143_97 = arith.constant 143 : index
    %160 = vector.load %arg12[%c0_96, %c143_97] : memref<8x401xf32, #tpu.memory_space<vmem>>, vector<8x256xf32>
    %cst_98 = arith.constant 0.000000e+00 : f32
    %161 = vector.shape_cast %122 : vector<1x256xi1> to vector<1x256xi1>
    %162 = vector.broadcast %161 : vector<1x256xi1> to vector<8x256xi1>
    %163 = vector.broadcast %cst_98 : f32 to vector<8x256xf32>
    %164 = arith.select %162, %160, %163 : vector<8x256xi1>, vector<8x256xf32>
    %c48 = arith.constant 48 : index
    %c0_99 = arith.constant 0 : index
    %165 = vector.load %arg13[%c48, %c0_99] : memref<72x256xf32, #tpu.memory_space<vmem>>, vector<8x256xf32>
    tpu.vector_store %arg13[%c48, %c0_99], %164 {strides = array<i32>} : memref<72x256xf32, #tpu.memory_space<vmem>>, vector<8x256xf32>,
    %c0_100 = arith.constant 0 : index
    %c144_101 = arith.constant 144 : index
    %166 = vector.load %arg12[%c0_100, %c144_101] : memref<8x401xf32, #tpu.memory_space<vmem>>, vector<8x256xf32>
    %c56 = arith.constant 56 : index
    %c0_102 = arith.constant 0 : index
    %167 = vector.load %arg13[%c56, %c0_102] : memref<72x256xf32, #tpu.memory_space<vmem>>, vector<8x256xf32>
    tpu.vector_store %arg13[%c56, %c0_102], %166 {strides = array<i32>} : memref<72x256xf32, #tpu.memory_space<vmem>>, vector<8x256xf32>,
    %c0_103 = arith.constant 0 : index
    %c145_104 = arith.constant 145 : index
    %168 = vector.load %arg12[%c0_103, %c145_104] : memref<8x401xf32, #tpu.memory_space<vmem>>, vector<8x256xf32>
    %cst_105 = arith.constant 0.000000e+00 : f32
    %169 = vector.shape_cast %131 : vector<1x256xi1> to vector<1x256xi1>
    %170 = vector.broadcast %169 : vector<1x256xi1> to vector<8x256xi1>
    %171 = vector.broadcast %cst_105 : f32 to vector<8x256xf32>
    %172 = arith.select %170, %168, %171 : vector<8x256xi1>, vector<8x256xf32>
    %c64 = arith.constant 64 : index
    %c0_106 = arith.constant 0 : index
    %173 = vector.load %arg13[%c64, %c0_106] : memref<72x256xf32, #tpu.memory_space<vmem>>, vector<8x256xf32>
    tpu.vector_store %arg13[%c64, %c0_106], %172 {strides = array<i32>} : memref<72x256xf32, #tpu.memory_space<vmem>>, vector<8x256xf32>,
    %c0_107 = arith.constant 0 : index
    %c0_108 = arith.constant 0 : index
    %174 = vector.load %arg4[%c0_107, %c0_108] : memref<32x72xf32, #tpu.memory_space<vmem>>, vector<32x72xf32>
    %c0_109 = arith.constant 0 : index
    %c0_110 = arith.constant 0 : index
    %175 = vector.load %arg13[%c0_109, %c0_110] : memref<72x256xf32, #tpu.memory_space<vmem>>, vector<72x256xf32>
    %cst_111 = arith.constant dense<0.000000e+00> : vector<32x256xf32>
    %176 = tpu.matmul %174, %175, %cst_111 {dimension_numbers = #tpu.dot_dimension_numbers<[1], [0], [0], [1], [0, 0, 1, 1], [], []>} : vector<32x72xf32>, vector<72x256xf32>, vector<32x256xf32> -> vector<32x256xf32>
    %c0_112 = arith.constant 0 : index
    %c0_113 = arith.constant 0 : index
    %177 = vector.load %arg5[%c0_112, %c0_113] : memref<32x1xf32, #tpu.memory_space<vmem>>, vector<32x1xf32>
    %178 = vector.broadcast %177 : vector<32x1xf32> to vector<32x256xf32>
    %179 = arith.addf %176, %178 : vector<32x256xf32>
    %180 = vector.extract_strided_slice %179 {offsets = [0, 0], sizes = [8, 256], strides = [1, 1]} : vector<32x256xf32> to vector<8x256xf32>
    %181 = arith.negf %180 : vector<8x256xf32>
    %182 = math.exp %181 : vector<8x256xf32>
    %cst_114 = arith.constant 1.000000e+00 : f32
    %183 = vector.broadcast %cst_114 : f32 to vector<8x256xf32>
    %184 = arith.addf %183, %182 : vector<8x256xf32>
    %185 = arith.divf %183, %184 : vector<8x256xf32>
    %186 = vector.extract_strided_slice %179 {offsets = [16, 0], sizes = [8, 256], strides = [1, 1]} : vector<32x256xf32> to vector<8x256xf32>
    %187 = arith.negf %186 : vector<8x256xf32>
    %188 = math.exp %187 : vector<8x256xf32>
    %cst_115 = arith.constant 1.000000e+00 : f32
    %189 = vector.broadcast %cst_115 : f32 to vector<8x256xf32>
    %190 = arith.addf %189, %188 : vector<8x256xf32>
    %191 = arith.divf %189, %190 : vector<8x256xf32>
    %192 = vector.extract_strided_slice %179 {offsets = [24, 0], sizes = [8, 256], strides = [1, 1]} : vector<32x256xf32> to vector<8x256xf32>
    %193 = math.tanh %192 : vector<8x256xf32>
    %194 = arith.mulf %185, %193 : vector<8x256xf32>
    %195 = math.tanh %194 : vector<8x256xf32>
    %196 = arith.mulf %191, %195 : vector<8x256xf32>
    %c0_116 = arith.constant 0 : index
    %c0_117 = arith.constant 0 : index
    %c0_118 = arith.constant 0 : index
    %197 = vector.load %arg8[%c0_116, %c0_117, %c0_118] : memref<1x8x256xf32, #tpu.memory_space<vmem>>, vector<1x8x256xf32>
    %198 = vector.shape_cast %197 : vector<1x8x256xf32> to vector<8x256xf32>
    %199 = vector.shape_cast %196 : vector<8x256xf32> to vector<1x8x256xf32>
    tpu.vector_store %arg8[%c0_116, %c0_117, %c0_118], %199 {strides = array<i32>} : memref<1x8x256xf32, #tpu.memory_space<vmem>>, vector<1x8x256xf32>,
    %c0_119 = arith.constant 0 : index
    %c0_120 = arith.constant 0 : index
    %c0_121 = arith.constant 0 : index
    %200 = vector.load %arg9[%c0_119, %c0_120, %c0_121] : memref<1x8x256xf32, #tpu.memory_space<vmem>>, vector<1x8x256xf32>
    %201 = vector.shape_cast %200 : vector<1x8x256xf32> to vector<8x256xf32>
    %202 = vector.shape_cast %194 : vector<8x256xf32> to vector<1x8x256xf32>
    tpu.vector_store %arg9[%c0_119, %c0_120, %c0_121], %202 {strides = array<i32>} : memref<1x8x256xf32, #tpu.memory_space<vmem>>, vector<1x8x256xf32>,
    return
  }
  func.func @transform_0(%arg0: i32) -> (i32, i32, i32) {
    %c0_i32 = arith.constant 0 : i32
    %c0_i32_0 = arith.constant 0 : i32
    %c0_i32_1 = arith.constant 0 : i32
    return %arg0, %c0_i32, %c0_i32_0 : i32, i32, i32
  }
  func.func @transform_1(%arg0: i32) -> (i32, i32) {
    %c0_i32 = arith.constant 0 : i32
    %c0_i32_0 = arith.constant 0 : i32
    %c0_i32_1 = arith.constant 0 : i32
    return %c0_i32, %c0_i32_0 : i32, i32
  }
  func.func @transform_2(%arg0: i32) -> (i32, i32) {
    %c0_i32 = arith.constant 0 : i32
    %c0_i32_0 = arith.constant 0 : i32
    %c0_i32_1 = arith.constant 0 : i32
    return %c0_i32, %c0_i32_0 : i32, i32
  }
  func.func @transform_3(%arg0: i32) -> (i32, i32) {
    %c0_i32 = arith.constant 0 : i32
    %c0_i32_0 = arith.constant 0 : i32
    %c0_i32_1 = arith.constant 0 : i32
    return %c0_i32, %c0_i32_0 : i32, i32
  }
  func.func @transform_4(%arg0: i32) -> (i32, i32) {
    %c0_i32 = arith.constant 0 : i32
    %c0_i32_0 = arith.constant 0 : i32
    %c0_i32_1 = arith.constant 0 : i32
    return %c0_i32, %c0_i32_0 : i32, i32
  }
  func.func @transform_5(%arg0: i32) -> (i32, i32, i32) {
    %c0_i32 = arith.constant 0 : i32
    %c0_i32_0 = arith.constant 0 : i32
    %c0_i32_1 = arith.constant 0 : i32
    return %arg0, %c0_i32, %c0_i32_0 : i32, i32, i32
  }
  func.func @transform_6(%arg0: i32) -> (i32, i32, i32) {
    %c0_i32 = arith.constant 0 : i32
    %c0_i32_0 = arith.constant 0 : i32
    %c0_i32_1 = arith.constant 0 : i32
    return %arg0, %c0_i32, %c0_i32_0 : i32, i32, i32
  }
  func.func @transform_7(%arg0: i32) -> (i32, i32, i32) {
    %c0_i32 = arith.constant 0 : i32
    %c0_i32_0 = arith.constant 0 : i32
    %c0_i32_1 = arith.constant 0 : i32
    return %arg0, %c0_i32, %c0_i32_0 : i32, i32, i32
  }
  func.func @transform_8(%arg0: i32) -> (i32, i32, i32) {
    %c0_i32 = arith.constant 0 : i32
    %c0_i32_0 = arith.constant 0 : i32
    %c0_i32_1 = arith.constant 0 : i32
    return %arg0, %c0_i32, %c0_i32_0 : i32, i32, i32
  }
}

</mosaic_0001>

<llo_original>
// kernel: tpu_custom_call.1
$region0: #{tpu_custom_call.1}
  #allocation0 [shape = 'u32[]', space=smem, size = 0x4, offset = 0x4, fixed_abs, tag = 'smem constant byte address 0x4 - core index']
  #allocation1 [shape = 'u32[72,128]{1,0:T(1,128)}', space=vmem, size = 0x9000, scoped, tag = 'internal scratch']
  #allocation2 [shape = 'f32[4,401]{1,0:T(4,128)}', space=vmem, size = 0x2000, scoped, tag = 'scratch operand']
  #allocation3 [shape = 'f32[36,256]{1,0:T(8,128)}', space=vmem, size = 0xa000, scoped, tag = 'scratch operand']
  #allocation4 [shape = 'f32[8,401]{1,0:T(8,128)}', space=vmem, size = 0x4000, scoped, tag = 'scratch operand']
  #allocation5 [shape = 'f32[72,256]{1,0:T(8,128)}', space=vmem, size = 0x12000, scoped, tag = 'scratch operand']
  %s0 = inlined_call_operand.hbm [shape: f32[2,4,256], index: 0, kind: input, shape index: {}]
  %s1 = inlined_call_operand.vmem [shape: f32[32,36], index: 1, kind: input, shape index: {}]
  %s2 = inlined_call_operand.vmem [shape: f32[32,1], index: 2, kind: input, shape index: {}]
  %s3 = inlined_call_operand.vmem [shape: f32[32,72], index: 3, kind: input, shape index: {}]
  %s4 = inlined_call_operand.vmem [shape: f32[32,1], index: 4, kind: input, shape index: {}]
  %s5 = inlined_call_operand.hbm [shape: f32[2,8,256], index: 5, kind: output, shape index: {0}]
  %s6 = inlined_call_operand.hbm [shape: f32[2,8,256], index: 6, kind: output, shape index: {1}]
  %s7 = inlined_call_operand.hbm [shape: f32[2,8,256], index: 7, kind: output, shape index: {2}]
  %s8 = inlined_call_operand.hbm [shape: f32[2,8,256], index: 8, kind: output, shape index: {3}]
  %9 = xla_tuple %s5, %s6, %s7, %s8
  %s10 = sld [smem:[#allocation0]]
  $region81: #{tpu_custom_call.1} parent=0
    _
  %s12 = ssub.s32 1, %s10
  %s13 = scalar_select 0, %s12, %s10
  $region1: #{tpu_custom_call.1} parent=0
    #allocation6 [shape = 'u8[8192]{0}', space=vmem, size = 0x2000, scoped, tag = 'input window, operand 0']
    #allocation7 [shape = 's32[2]{0}', space=sflag, size = 0x8, scoped, tag = 'scoped memory for tpu_custom_call.1']
    #allocation8 [shape = 's32[2]{0}', space=sflag, size = 0x8, scoped, tag = 'scoped memory for tpu_custom_call.1']
    #allocation9 [shape = 'u8[16384]{0}', space=vmem, size = 0x4000, scoped, tag = 'output window, operand 0']
    #allocation10 [shape = 'u8[16384]{0}', space=vmem, size = 0x4000, scoped, tag = 'output window, operand 1']
    #allocation11 [shape = 's32[2]{0}', space=sflag, size = 0x8, scoped, tag = 'scoped memory for tpu_custom_call.1']
    #allocation12 [shape = 'u8[16384]{0}', space=vmem, size = 0x4000, scoped, tag = 'output window, operand 2']
    #allocation13 [shape = 'u8[16384]{0}', space=vmem, size = 0x4000, scoped, tag = 'output window, operand 3']
    #allocation14 [shape = 's32[2]{0}', space=sflag, size = 0x8, scoped, tag = 'scoped memory for tpu_custom_call.1']
    %14 = vsyncpa [#allocation7], 0
    %s15 = scalar_lea.sflag [#allocation7], 1
    %16 = vsyncpa %s15, 0
    %17 = vsyncpa [#allocation8], 0
    %s18 = scalar_lea.sflag [#allocation8], 1
    %19 = vsyncpa %s18, 0
    %20 = vsyncpa [#allocation11], 0
    %s21 = scalar_lea.sflag [#allocation11], 1
    %22 = vsyncpa %s21, 0
    %23 = vsyncpa [#allocation14], 0
    %s24 = scalar_lea.sflag [#allocation14], 1
    %25 = vsyncpa %s24, 0
    loop: start=0, step=1, limit=4
    $region2: #{tpu_custom_call.1} parent=1 // loop_pre_header
      _
    $region3: #{tpu_custom_call.1} parent=1 // loop_header
      %s27 = sphi 0, %s31
      %p28 = scmp.ge.s32.totalorder %s27, 4
      %s37 = sphi 0, %s39
      %s40 = sphi 0, %s37
      %s41 = sphi 0, %s40
      %s57 = sphi 0, %s41
      %s61 = sphi 0, %s61
      %s63 = sphi 0, %s61
      %s64 = sphi 0, %s63
      %s78 = sphi 0, %s64
      %s82 = sphi 0, %s82
      %s84 = sphi 0, %s82
      %s85 = sphi 0, %s84
      %s99 = sphi 0, %s85
      %s103 = sphi 0, %s103
      %s105 = sphi 0, %s103
      %s106 = sphi 0, %s105
      %s120 = sphi 0, %s106
      %s124 = sphi 0, %s124
      %s126 = sphi 0, %s124
      %s127 = sphi 0, %s126
      %s141 = sphi 0, %s127
      %s147 = sphi 0, %s149
      %s150 = sphi 0, %s147
      %s151 = sphi 0, %s150
      %s167 = sphi 0, %s151
      %s173 = sphi 0, %s175
      %s176 = sphi 0, %s173
      %s177 = sphi 0, %s176
      %s193 = sphi 0, %s177
      %s199 = sphi 0, %s201
      %s202 = sphi 0, %s199
      %s203 = sphi 0, %s202
      %s219 = sphi 0, %s203
      %s225 = sphi 0, %s227
      %s228 = sphi 0, %s225
      %s229 = sphi 0, %s228
      %s245 = sphi 0, %s229
    $region4: #{tpu_custom_call.1} parent=1 // loop_header_branch
      %30 = sbr.rel (%p28) target = $region8
    $region5: #{tpu_custom_call.1} parent=1 // loop_body
      %s32 = ssub.s32 %s27, 1
      %s33 = ssub.s32 %s27, 2
      %s34 = sadd.s32 %s27, 1
      %s35 = ssub.s32 %s27, %s34
      %p36 = scmp.eq.s32.totalorder %s35, 0
      %s38 = sadd.s32 %s37, 1
      %s39 = scalar_select %p36, %s37, %s38
      %p42 = pneg %p36
      %p43 = scmp.eq.s32.totalorder %s27, 1
      %p44 = por %p42, %p43
      %p45 = scmp.ne.s32.totalorder %s37, %s40
      %p46 = scmp.eq.s32.totalorder %s27, 0
      %p47 = por %p45, %p46
      %p48 = scmp.ne.s32.totalorder %s37, %s40
      %p49 = scmp.eq.s32.totalorder %s32, 1
      %p50 = por %p48, %p49
      %p51 = scmp.ne.s32.totalorder %s40, %s41
      %p52 = scmp.eq.s32.totalorder %s32, 0
      %p53 = por %p51, %p52
      %p54 = scmp.ne.s32.totalorder %s40, %s41
      %p55 = scmp.eq.s32.totalorder %s33, 1
      %p56 = por %p54, %p55
      %p58 = scmp.ne.s32.totalorder %s41, %s57
      %p59 = scmp.eq.s32.totalorder %s33, 0
      %p60 = por %p58, %p59
      %s62 = sadd.s32 %s61, 1
      %p65 = scmp.eq.s32.totalorder %s27, 1
      %p66 = scmp.ne.s32.totalorder %s61, %s63
      %p67 = scmp.eq.s32.totalorder %s27, 0
      %p68 = por %p66, %p67
      %p69 = scmp.ne.s32.totalorder %s61, %s63
      %p70 = scmp.eq.s32.totalorder %s32, 1
      %p71 = por %p69, %p70
      %p72 = scmp.ne.s32.totalorder %s63, %s64
      %p73 = scmp.eq.s32.totalorder %s32, 0
      %p74 = por %p72, %p73
      %p75 = scmp.ne.s32.totalorder %s63, %s64
      %p76 = scmp.eq.s32.totalorder %s33, 1
      %p77 = por %p75, %p76
      %p79 = scmp.ne.s32.totalorder %s64, %s78
      %p80 = scmp.eq.s32.totalorder %s33, 0
      %p81 = por %p79, %p80
      %s83 = sadd.s32 %s82, 1
      %p86 = scmp.eq.s32.totalorder %s27, 1
      %p87 = scmp.ne.s32.totalorder %s82, %s84
      %p88 = scmp.eq.s32.totalorder %s27, 0
      %p89 = por %p87, %p88
      %p90 = scmp.ne.s32.totalorder %s82, %s84
      %p91 = scmp.eq.s32.totalorder %s32, 1
      %p92 = por %p90, %p91
      %p93 = scmp.ne.s32.totalorder %s84, %s85
      %p94 = scmp.eq.s32.totalorder %s32, 0
      %p95 = por %p93, %p94
      %p96 = scmp.ne.s32.totalorder %s84, %s85
      %p97 = scmp.eq.s32.totalorder %s33, 1
      %p98 = por %p96, %p97
      %p100 = scmp.ne.s32.totalorder %s85, %s99
      %p101 = scmp.eq.s32.totalorder %s33, 0
      %p102 = por %p100, %p101
      %s104 = sadd.s32 %s103, 1
      %p107 = scmp.eq.s32.totalorder %s27, 1
      %p108 = scmp.ne.s32.totalorder %s103, %s105
      %p109 = scmp.eq.s32.totalorder %s27, 0
      %p110 = por %p108, %p109
      %p111 = scmp.ne.s32.totalorder %s103, %s105
      %p112 = scmp.eq.s32.totalorder %s32, 1
      %p113 = por %p111, %p112
      %p114 = scmp.ne.s32.totalorder %s105, %s106
      %p115 = scmp.eq.s32.totalorder %s32, 0
      %p116 = por %p114, %p115
      %p117 = scmp.ne.s32.totalorder %s105, %s106
      %p118 = scmp.eq.s32.totalorder %s33, 1
      %p119 = por %p117, %p118
      %p121 = scmp.ne.s32.totalorder %s106, %s120
      %p122 = scmp.eq.s32.totalorder %s33, 0
      %p123 = por %p121, %p122
      %s125 = sadd.s32 %s124, 1
      %p128 = scmp.eq.s32.totalorder %s27, 1
      %p129 = scmp.ne.s32.totalorder %s124, %s126
      %p130 = scmp.eq.s32.totalorder %s27, 0
      %p131 = por %p129, %p130
      %p132 = scmp.ne.s32.totalorder %s124, %s126
      %p133 = scmp.eq.s32.totalorder %s32, 1
      %p134 = por %p132, %p133
      %p135 = scmp.ne.s32.totalorder %s126, %s127
      %p136 = scmp.eq.s32.totalorder %s32, 0
      %p137 = por %p135, %p136
      %p138 = scmp.ne.s32.totalorder %s126, %s127
      %p139 = scmp.eq.s32.totalorder %s33, 1
      %p140 = por %p138, %p139
      %p142 = scmp.ne.s32.totalorder %s127, %s141
      %p143 = scmp.eq.s32.totalorder %s33, 0
      %p144 = por %p142, %p143
      %s145 = ssub.s32 %s27, %s34
      %p146 = scmp.eq.s32.totalorder %s145, 0
      %s148 = sadd.s32 %s147, 1
      %s149 = scalar_select %p146, %s147, %s148
      %p152 = pneg %p146
      %p153 = scmp.eq.s32.totalorder %s27, 1
      %p154 = por %p152, %p153
      %p155 = scmp.ne.s32.totalorder %s147, %s150
      %p156 = scmp.eq.s32.totalorder %s27, 0
      %p157 = por %p155, %p156
      %p158 = scmp.ne.s32.totalorder %s147, %s150
      %p159 = scmp.eq.s32.totalorder %s32, 1
      %p160 = por %p158, %p159
      %p161 = scmp.ne.s32.totalorder %s150, %s151
      %p162 = scmp.eq.s32.totalorder %s32, 0
      %p163 = por %p161, %p162
      %p164 = scmp.ne.s32.totalorder %s150, %s151
      %p165 = scmp.eq.s32.totalorder %s33, 1
      %p166 = por %p164, %p165
      %p168 = scmp.ne.s32.totalorder %s151, %s167
      %p169 = scmp.eq.s32.totalorder %s33, 0
      %p170 = por %p168, %p169
      %s171 = ssub.s32 %s27, %s34
      %p172 = scmp.eq.s32.totalorder %s171, 0
      %s174 = sadd.s32 %s173, 1
      %s175 = scalar_select %p172, %s173, %s174
      %p178 = pneg %p172
      %p179 = scmp.eq.s32.totalorder %s27, 1
      %p180 = por %p178, %p179
      %p181 = scmp.ne.s32.totalorder %s173, %s176
      %p182 = scmp.eq.s32.totalorder %s27, 0
      %p183 = por %p181, %p182
      %p184 = scmp.ne.s32.totalorder %s173, %s176
      %p185 = scmp.eq.s32.totalorder %s32, 1
      %p186 = por %p184, %p185
      %p187 = scmp.ne.s32.totalorder %s176, %s177
      %p188 = scmp.eq.s32.totalorder %s32, 0
      %p189 = por %p187, %p188
      %p190 = scmp.ne.s32.totalorder %s176, %s177
      %p191 = scmp.eq.s32.totalorder %s33, 1
      %p192 = por %p190, %p191
      %p194 = scmp.ne.s32.totalorder %s177, %s193
      %p195 = scmp.eq.s32.totalorder %s33, 0
      %p196 = por %p194, %p195
      %s197 = ssub.s32 %s27, %s34
      %p198 = scmp.eq.s32.totalorder %s197, 0
      %s200 = sadd.s32 %s199, 1
      %s201 = scalar_select %p198, %s199, %s200
      %p204 = pneg %p198
      %p205 = scmp.eq.s32.totalorder %s27, 1
      %p206 = por %p204, %p205
      %p207 = scmp.ne.s32.totalorder %s199, %s202
      %p208 = scmp.eq.s32.totalorder %s27, 0
      %p209 = por %p207, %p208
      %p210 = scmp.ne.s32.totalorder %s199, %s202
      %p211 = scmp.eq.s32.totalorder %s32, 1
      %p212 = por %p210, %p211
      %p213 = scmp.ne.s32.totalorder %s202, %s203
      %p214 = scmp.eq.s32.totalorder %s32, 0
      %p215 = por %p213, %p214
      %p216 = scmp.ne.s32.totalorder %s202, %s203
      %p217 = scmp.eq.s32.totalorder %s33, 1
      %p218 = por %p216, %p217
      %p220 = scmp.ne.s32.totalorder %s203, %s219
      %p221 = scmp.eq.s32.totalorder %s33, 0
      %p222 = por %p220, %p221
      %s223 = ssub.s32 %s27, %s34
      %p224 = scmp.eq.s32.totalorder %s223, 0
      %s226 = sadd.s32 %s225, 1
      %s227 = scalar_select %p224, %s225, %s226
      %p230 = pneg %p224
      %p231 = scmp.eq.s32.totalorder %s27, 1
      %p232 = por %p230, %p231
      %p233 = scmp.ne.s32.totalorder %s225, %s228
      %p234 = scmp.eq.s32.totalorder %s27, 0
      %p235 = por %p233, %p234
      %p236 = scmp.ne.s32.totalorder %s225, %s228
      %p237 = scmp.eq.s32.totalorder %s32, 1
      %p238 = por %p236, %p237
      %p239 = scmp.ne.s32.totalorder %s228, %s229
      %p240 = scmp.eq.s32.totalorder %s32, 0
      %p241 = por %p239, %p240
      %p242 = scmp.ne.s32.totalorder %s228, %s229
      %p243 = scmp.eq.s32.totalorder %s33, 1
      %p244 = por %p242, %p243
      %p246 = scmp.ne.s32.totalorder %s229, %s245
      %p247 = scmp.eq.s32.totalorder %s33, 0
      %p248 = por %p246, %p247
      %p249 = scmp.le.s32.totalorder 1, %s27
      %p250 = scmp.lt.s32.totalorder %s27, 3
      %p251 = pnand %p249, %p250
      %p252 = pneg %p251
      // Predicated region
      $region9: #{tpu_custom_call.1} parent=5 // pred_check
        _
      $region10: #{tpu_custom_call.1} parent=5 // pred_check_branch
        %254 = sbr.rel (%p251) target = $region12
      $region11: #{tpu_custom_call.1} parent=5 // pred_region
        %s255 = ssub.s32 %s27, 1
        // Predicated region
        $region13: #{tpu_custom_call.1} parent=11 // pred_check
          %p256 = pneg %p74
        $region14: #{tpu_custom_call.1} parent=11 // pred_check_branch
          %258 = sbr.rel (%p256) target = $region16
        $region15: #{tpu_custom_call.1} parent=11 // pred_region
          _
        $region16: #{tpu_custom_call.1} parent=11 // pred_fallthru
          _
        // Predicated region
        $region17: #{tpu_custom_call.1} parent=11 // pred_check
          %p259 = pneg %p95
        $region18: #{tpu_custom_call.1} parent=11 // pred_check_branch
          %261 = sbr.rel (%p259) target = $region20
        $region19: #{tpu_custom_call.1} parent=11 // pred_region
          _
        $region20: #{tpu_custom_call.1} parent=11 // pred_fallthru
          _
        // Predicated region
        $region21: #{tpu_custom_call.1} parent=11 // pred_check
          %p262 = pneg %p116
        $region22: #{tpu_custom_call.1} parent=11 // pred_check_branch
          %264 = sbr.rel (%p262) target = $region24
        $region23: #{tpu_custom_call.1} parent=11 // pred_region
          _
        $region24: #{tpu_custom_call.1} parent=11 // pred_fallthru
          _
        // Predicated region
        $region25: #{tpu_custom_call.1} parent=11 // pred_check
          %p265 = pneg %p137
        $region26: #{tpu_custom_call.1} parent=11 // pred_check_branch
          %267 = sbr.rel (%p265) target = $region28
        $region27: #{tpu_custom_call.1} parent=11 // pred_region
          _
        $region28: #{tpu_custom_call.1} parent=11 // pred_fallthru
          _
      $region12: #{tpu_custom_call.1} parent=5 // pred_fallthru
        _
      %p268 = scmp.lt.s32.totalorder %s27, 2
      // Predicated region
      $region29: #{tpu_custom_call.1} parent=5 // pred_check
        %p269 = pneg %p268
      $region30: #{tpu_custom_call.1} parent=5 // pred_check_branch
        %271 = sbr.rel (%p269) target = $region32
      $region31: #{tpu_custom_call.1} parent=5 // pred_region
        // Predicated region
        $region33: #{tpu_custom_call.1} parent=31 // pred_check
          %p272 = pneg %p47
        $region34: #{tpu_custom_call.1} parent=31 // pred_check_branch
          %274 = sbr.rel (%p272) target = $region36
        $region35: #{tpu_custom_call.1} parent=31 // pred_region
          %s275 = sand.u32 %s37, 1
          %s276 = scalar_lea.sflag [#allocation7], %s275
          %s277 = sand.u32 %s37, 1
          %s278 = smul.addr %s277, 8
          %s279 = scalar_lea.vmem [#allocation6], %s278
          %281 = vsyncadd %s276, 0
          %s282 = smul.addr %s27, 2
          %s283 = smul.addr %s282, 4
          %s284 = scalar_lea.hbm %s0, %s283
          %s286 = sshll.u32 %s284, 4
          %s287 = int_to_ptr.hbm [resolvable:$true] %s286
          %s288 = sshll.u32 %s279, 4
          %s289 = int_to_ptr.vmem [resolvable:$true] %s288
          %291 = dma.hbm_to_vmem [thread:$0]  %s287, 128, %s289, %s276
        $region36: #{tpu_custom_call.1} parent=31 // pred_fallthru
          _
      $region32: #{tpu_custom_call.1} parent=5 // pred_fallthru
        _
      %p292 = scmp.le.s32.totalorder 1, %s27
      %p293 = scmp.lt.s32.totalorder %s27, 3
      %p294 = pnand %p292, %p293
      %p295 = pneg %p294
      // Predicated region
      $region37: #{tpu_custom_call.1} parent=5 // pred_check
        _
      $region38: #{tpu_custom_call.1} parent=5 // pred_check_branch
        %297 = sbr.rel (%p294) target = $region40
      $region39: #{tpu_custom_call.1} parent=5 // pred_region
        %s298 = ssub.s32 %s27, 1
        %s299 = sand.u32 %s40, 1
        %s300 = scalar_lea.sflag [#allocation7], %s299
        %s301 = sand.u32 %s40, 1
        %s302 = smul.addr %s301, 8
        %s303 = scalar_lea.vmem [#allocation6], %s302
        // Predicated region
        $region41: #{tpu_custom_call.1} parent=39 // pred_check
          %p304 = pneg %p53
        $region42: #{tpu_custom_call.1} parent=39 // pred_check_branch
          %306 = sbr.rel (%p304) target = $region44
        $region43: #{tpu_custom_call.1} parent=39 // pred_region
          %308 = dma.done %s300, 128
        $region44: #{tpu_custom_call.1} parent=39 // pred_fallthru
          _
        %s309 = sand.u32 %s40, 1
        %s310 = scalar_lea.sflag [#allocation7], %s309
        %s311 = sand.u32 %s40, 1
        %s312 = smul.addr %s311, 8
        %s313 = scalar_lea.vmem [#allocation6], %s312
        %p314 = pneg %p53
        %p315 = pneg %p50
        %p316 = pneg %p74
        %p317 = pneg %p71
        %p318 = pneg %p95
        %p319 = pneg %p92
        %p320 = pneg %p116
        %p321 = pneg %p113
        %p322 = pneg %p137
        %p323 = pneg %p134
        %p324 = pneg %p163
        %p325 = pneg %p160
        %s326 = sand.u32 %s150, 1
        %s327 = scalar_lea.sflag [#allocation8], %s326
        %s328 = sand.u32 %s150, 1
        %s329 = smul.addr %s328, 16
        %s330 = scalar_lea.vmem [#allocation9], %s329
        %p331 = pneg %p189
        %p332 = pneg %p186
        %s333 = sand.u32 %s32, 1
        %s334 = scalar_lea.sflag [#allocation11], %s333
        %s335 = sand.u32 %s176, 1
        %s336 = smul.addr %s335, 16
        %s337 = scalar_lea.vmem [#allocation10], %s336
        %p338 = pneg %p215
        %p339 = pneg %p212
        %s340 = sand.u32 %s32, 1
        %s341 = scalar_lea.sflag [#allocation11], %s340
        %s342 = sand.u32 %s202, 1
        %s343 = smul.addr %s342, 16
        %s344 = scalar_lea.vmem [#allocation12], %s343
        %p345 = pneg %p241
        %p346 = pneg %p238
        %s347 = sand.u32 %s228, 1
        %s348 = scalar_lea.sflag [#allocation14], %s347
        %s349 = sand.u32 %s228, 1
        %s350 = smul.addr %s349, 16
        %s351 = scalar_lea.vmem [#allocation13], %s350
        %v352 = vlaneseq
        %v353 = vand.u32 %v352, 127
        %v354 = vadd.s32 %v353, 128
        %vm355 = vcmp.lt.s32.totalorder %v353, 0
        %v356 = vsub.s32 0, %v353
        %v357 = vsel %vm355, %v356, %v353
        %v358 = vshrl.u32 %v357, 4
        %v359 = vand.u32 %v357, 15
        %v360 = vsub.s32 0, %v359
        %v361 = vsel %vm355, %v360, %v359
        %vm362 = vcmp.lt.s32.totalorder %v354, 0
        %v363 = vsub.s32 0, %v354
        %v364 = vsel %vm362, %v363, %v354
        %v365 = vshrl.u32 %v364, 4
        %v366 = vand.u32 %v364, 15
        %v367 = vsub.s32 0, %v366
        %v368 = vsel %vm362, %v367, %v366
        %vm369 = vcmp.ne.s32.totalorder %v361, 0
        %vm370 = vcmp.ne.s32.totalorder %v368, 0
        %vm371 = vcmp.lt.s32.totalorder %v361, 0
        %vm372 = vcmp.lt.s32.totalorder %v368, 0
        %vm373 = vmand %vm371, %vm369
        %vm374 = vmand %vm372, %vm370
        %v375 = vadd.s32 %v361, 16
        %v376 = vadd.s32 %v368, 16
        %v377 = vsel %vm373, %v375, %v361
        %v378 = vsel %vm374, %v376, %v368
        %v379 = vld [vmem:[%s303] sm:$0xff]
        %380 = vst [vmem:[#allocation2] sm:$0xff] 0.0
        %vm381 = vcmask 1043456
        %vm382 = vcmask 138244
        %vm383 = vmor %vm382, %vm381
        %384 = vst.msk [vmem:[#allocation2 + $0x8] sm:$0xff] %vm383, 0.0
        %385 = vst [vmem:[#allocation2 + $0x4] sm:$0xff] %v379
        %v386 = vadd.s32 %v377, 4294967295
        %v387 = vadd.s32 %v378, 4294967295
        %vm388 = vcmp.ge.s32.totalorder %v386, 0
        %vm389 = vcmp.ge.s32.totalorder %v387, 0
        %vm390 = vcmp.lt.s32.totalorder %v386, 16
        %vm391 = vcmp.lt.s32.totalorder %v387, 16
        %vm392 = vmand %vm388, %vm390
        %vm393 = vmand %vm389, %vm391
        %v394 = vadd.s32 %v377, 1
        %v395 = vadd.s32 %v378, 1
        %vm396 = vcmp.ge.s32.totalorder %v394, 0
        %vm397 = vcmp.ge.s32.totalorder %v395, 0
        %vm398 = vcmp.lt.s32.totalorder %v394, 16
        %vm399 = vcmp.lt.s32.totalorder %v395, 16
        %vm400 = vmand %vm396, %vm398
        %vm401 = vmand %vm397, %vm399
        %v402 = vld [vmem:[#allocation2] sm:$0xff]
        %v403 = vld [vmem:[#allocation2 + $0x8] sm:$0xf]
        %v404 = vsel %vm392, 1, 0
        %v405 = vsel %vm393, 1, 0
        %vm406 = vcmp.eq.s32.totalorder %v404, 1
        %vm407 = vcmp.eq.s32.totalorder %v405, 1
        %410 = vst [vmem:[#allocation1] ss:$2 sm:$0xff] %v402
        %s411 = scalar_lea.vmem [#allocation1], 16
        %412 = vst [vmem:[%s411] ss:$2 sm:$0xff] %v403
        %v413 = vld.sshfl [vmem:[#allocation1] sm:$0xff pattern:$0x75316420]
        %v414 = vld.sshfl [vmem:[#allocation1 + $0x8] sm:$0xff pattern:$0x75316420]
        %v415 = vld.sshfl [vmem:[#allocation1 + $0x10] sm:$0xff pattern:$0x75316420]
        %416 = vrot.lane.b32.xlu0 %v413, 17
        %v417 = vpop.permute.xlu0 %416
        %418 = vrot.lane.b32.xlu0 %v414, 17
        %v419 = vpop.permute.xlu0 %418
        %420 = vrot.lane.b32.xlu0 %v415, 17
        %v421 = vpop.permute.xlu0 %420
        %vm422 = vcmask 138240
        %v423 = vsel %vm422, %v417, %v419
        %v424 = vsel %vm422, %v419, %v421
        %v427 = vsel %vm406, %v423, 0.0
        %v428 = vsel %vm407, %v424, 0.0
        %429 = vst [vmem:[#allocation3] sm:$0xf] %v427
        %430 = vst [vmem:[#allocation3 + $0x8] sm:$0xf] %v428
        %v431 = vld [vmem:[#allocation2] sm:$0xff]
        %v432 = vld [vmem:[#allocation2 + $0x8] sm:$0xf]
        %s435 = scalar_lea.vmem [#allocation1], 1
        %436 = vst [vmem:[%s435] ss:$2 sm:$0xff] %v431
        %s437 = scalar_lea.vmem [#allocation1], 17
        %438 = vst [vmem:[%s437] ss:$2 sm:$0xff] %v432
        %v439 = vld.sshfl [vmem:[#allocation1] sm:$0xff pattern:$0x75316420]
        %v440 = vld.sshfl [vmem:[#allocation1 + $0x8] sm:$0xff pattern:$0x75316420]
        %v441 = vld.sshfl [vmem:[#allocation1 + $0x10] sm:$0xff pattern:$0x75316420]
        %442 = vrot.lane.b32.xlu0 %v439, 16
        %v443 = vpop.permute.xlu0 %442
        %444 = vrot.lane.b32.xlu0 %v440, 16
        %v445 = vpop.permute.xlu0 %444
        %446 = vrot.lane.b32.xlu0 %v441, 16
        %v447 = vpop.permute.xlu0 %446
        %vm448 = vcmask 130048
        %v449 = vsel %vm448, %v443, %v445
        %v450 = vsel %vm448, %v445, %v447
        %453 = vst [vmem:[#allocation3] sm:$0xf0] %v449
        %454 = vst [vmem:[#allocation3 + $0x8] sm:$0xf0] %v450
        %v455 = vld [vmem:[#allocation2] sm:$0xff]
        %v456 = vld [vmem:[#allocation2 + $0x8] sm:$0xf]
        %v457 = vsel %vm400, 1, 0
        %v458 = vsel %vm401, 1, 0
        %vm459 = vcmp.eq.s32.totalorder %v457, 1
        %vm460 = vcmp.eq.s32.totalorder %v458, 1
        %463 = vst [vmem:[#allocation1] ss:$2 sm:$0xff] %v455
        %s464 = scalar_lea.vmem [#allocation1], 16
        %465 = vst [vmem:[%s464] ss:$2 sm:$0xff] %v456
        %v466 = vld.sshfl [vmem:[#allocation1] sm:$0xff pattern:$0x75316420]
        %v467 = vld.sshfl [vmem:[#allocation1 + $0x8] sm:$0xff pattern:$0x75316420]
        %v468 = vld.sshfl [vmem:[#allocation1 + $0x10] sm:$0xff pattern:$0x75316420]
        %469 = vrot.lane.b32.xlu0 %v466, 15
        %v470 = vpop.permute.xlu0 %469
        %471 = vrot.lane.b32.xlu0 %v467, 15
        %v472 = vpop.permute.xlu0 %471
        %473 = vrot.lane.b32.xlu0 %v468, 15
        %v474 = vpop.permute.xlu0 %473
        %vm475 = vcmask 121856
        %v476 = vsel %vm475, %v470, %v472
        %v477 = vsel %vm475, %v472, %v474
        %v480 = vsel %vm459, %v476, 0.0
        %v481 = vsel %vm460, %v477, 0.0
        %482 = vst [vmem:[#allocation3 + $0x10] sm:$0xf] %v480
        %483 = vst [vmem:[#allocation3 + $0x18] sm:$0xf] %v481
        %v484 = vld [vmem:[#allocation2] sm:$0xff]
        %v485 = vld [vmem:[#allocation2 + $0x8] sm:$0xf]
        %488 = vst [vmem:[#allocation1] ss:$2 sm:$0xff] %v484
        %s489 = scalar_lea.vmem [#allocation1], 16
        %490 = vst [vmem:[%s489] ss:$2 sm:$0xff] %v485
        %v491 = vld.sshfl [vmem:[#allocation1] sm:$0xff pattern:$0x75316420]
        %v492 = vld.sshfl [vmem:[#allocation1 + $0x8] sm:$0xff pattern:$0x75316420]
        %v493 = vld.sshfl [vmem:[#allocation1 + $0x10] sm:$0xff pattern:$0x75316420]
        %494 = vrot.lane.b32.xlu0 %v491, 1
        %v495 = vpop.permute.xlu0 %494
        %496 = vrot.lane.b32.xlu0 %v492, 1
        %v497 = vpop.permute.xlu0 %496
        %498 = vrot.lane.b32.xlu0 %v493, 1
        %v499 = vpop.permute.xlu0 %498
        %vm500 = vcmask 7168
        %v501 = vsel %vm500, %v495, %v497
        %v502 = vsel %vm500, %v497, %v499
        %v505 = vsel %vm406, %v501, 0.0
        %v506 = vsel %vm407, %v502, 0.0
        %v509 = vrot.slane %v505, 4
        %v510 = vrot.slane %v506, 4
        %513 = vst [vmem:[#allocation3 + $0x10] sm:$0xf0] %v509
        %514 = vst [vmem:[#allocation3 + $0x18] sm:$0xf0] %v510
        %v515 = vld [vmem:[#allocation2 + $0x4] sm:$0xff]
        %517 = vst [vmem:[#allocation1] ss:$2 sm:$0xff] %v515
        %v518 = vld.sshfl [vmem:[#allocation1] sm:$0xff pattern:$0x75316420]
        %v519 = vld.sshfl [vmem:[#allocation1 + $0x8] sm:$0xff pattern:$0x75316420]
        %522 = vst [vmem:[#allocation3 + $0x20] sm:$0xf] %v518
        %523 = vst [vmem:[#allocation3 + $0x28] sm:$0xf] %v519
        %v524 = vld [vmem:[#allocation2 + $0x4] sm:$0xff]
        %v525 = vld [vmem:[#allocation2 + $0xc] sm:$0xf]
        %528 = vst [vmem:[#allocation1] ss:$2 sm:$0xff] %v524
        %s529 = scalar_lea.vmem [#allocation1], 16
        %530 = vst [vmem:[%s529] ss:$2 sm:$0xff] %v525
        %v531 = vld.sshfl [vmem:[#allocation1] sm:$0xff pattern:$0x75316420]
        %v532 = vld.sshfl [vmem:[#allocation1 + $0x8] sm:$0xff pattern:$0x75316420]
        %v533 = vld.sshfl [vmem:[#allocation1 + $0x10] sm:$0xff pattern:$0x75316420]
        %534 = vrot.lane.b32.xlu0 %v531, 127
        %v535 = vpop.permute.xlu0 %534
        %536 = vrot.lane.b32.xlu0 %v532, 127
        %v537 = vpop.permute.xlu0 %536
        %538 = vrot.lane.b32.xlu0 %v533, 127
        %v539 = vpop.permute.xlu0 %538
        %vm540 = vcmask 1039360
        %v541 = vsel %vm540, %v535, %v537
        %v542 = vsel %vm540, %v537, %v539
        %v545 = vsel %vm459, %v541, 0.0
        %v546 = vsel %vm460, %v542, 0.0
        %v549 = vrot.slane %v545, 4
        %v550 = vrot.slane %v546, 4
        %553 = vst [vmem:[#allocation3 + $0x20] sm:$0xf0] %v549
        %554 = vst [vmem:[#allocation3 + $0x28] sm:$0xf0] %v550
        %v555 = vld [vmem:[#allocation2 + $0x4] sm:$0xff]
        %v556 = vld [vmem:[#allocation2 + $0xc] sm:$0xf]
        %559 = vst [vmem:[#allocation1] ss:$2 sm:$0xff] %v555
        %s560 = scalar_lea.vmem [#allocation1], 16
        %561 = vst [vmem:[%s560] ss:$2 sm:$0xff] %v556
        %v562 = vld.sshfl [vmem:[#allocation1] sm:$0xff pattern:$0x75316420]
        %v563 = vld.sshfl [vmem:[#allocation1 + $0x8] sm:$0xff pattern:$0x75316420]
        %v564 = vld.sshfl [vmem:[#allocation1 + $0x10] sm:$0xff pattern:$0x75316420]
        %565 = vrot.lane.b32.xlu0 %v562, 113
        %v566 = vpop.permute.xlu0 %565
        %567 = vrot.lane.b32.xlu0 %v563, 113
        %v568 = vpop.permute.xlu0 %567
        %569 = vrot.lane.b32.xlu0 %v564, 113
        %v570 = vpop.permute.xlu0 %569
        %vm571 = vcmask 924672
        %v572 = vsel %vm571, %v566, %v568
        %v573 = vsel %vm571, %v568, %v570
        %v576 = vsel %vm406, %v572, 0.0
        %v577 = vsel %vm407, %v573, 0.0
        %578 = vst [vmem:[#allocation3 + $0x30] sm:$0xf] %v576
        %579 = vst [vmem:[#allocation3 + $0x38] sm:$0xf] %v577
        %v580 = vld [vmem:[#allocation2 + $0x4] sm:$0xff]
        %v581 = vld [vmem:[#allocation2 + $0xc] sm:$0xf]
        %s584 = scalar_lea.vmem [#allocation1], 1
        %585 = vst [vmem:[%s584] ss:$2 sm:$0xff] %v580
        %s586 = scalar_lea.vmem [#allocation1], 17
        %587 = vst [vmem:[%s586] ss:$2 sm:$0xff] %v581
        %v588 = vld.sshfl [vmem:[#allocation1] sm:$0xff pattern:$0x75316420]
        %v589 = vld.sshfl [vmem:[#allocation1 + $0x8] sm:$0xff pattern:$0x75316420]
        %v590 = vld.sshfl [vmem:[#allocation1 + $0x10] sm:$0xff pattern:$0x75316420]
        %591 = vrot.lane.b32.xlu0 %v588, 112
        %v592 = vpop.permute.xlu0 %591
        %593 = vrot.lane.b32.xlu0 %v589, 112
        %v594 = vpop.permute.xlu0 %593
        %595 = vrot.lane.b32.xlu0 %v590, 112
        %v596 = vpop.permute.xlu0 %595
        %vm597 = vcmask 916480
        %v598 = vsel %vm597, %v592, %v594
        %v599 = vsel %vm597, %v594, %v596
        %602 = vst [vmem:[#allocation3 + $0x30] sm:$0xf0] %v598
        %603 = vst [vmem:[#allocation3 + $0x38] sm:$0xf0] %v599
        %v604 = vld [vmem:[#allocation2 + $0x4] sm:$0xff]
        %v605 = vld [vmem:[#allocation2 + $0xc] sm:$0xf]
        %608 = vst [vmem:[#allocation1] ss:$2 sm:$0xff] %v604
        %s609 = scalar_lea.vmem [#allocation1], 16
        %610 = vst [vmem:[%s609] ss:$2 sm:$0xff] %v605
        %v611 = vld.sshfl [vmem:[#allocation1] sm:$0xff pattern:$0x75316420]
        %v612 = vld.sshfl [vmem:[#allocation1 + $0x8] sm:$0xff pattern:$0x75316420]
        %v613 = vld.sshfl [vmem:[#allocation1 + $0x10] sm:$0xff pattern:$0x75316420]
        %614 = vrot.lane.b32.xlu0 %v611, 111
        %v615 = vpop.permute.xlu0 %614
        %616 = vrot.lane.b32.xlu0 %v612, 111
        %v617 = vpop.permute.xlu0 %616
        %618 = vrot.lane.b32.xlu0 %v613, 111
        %v619 = vpop.permute.xlu0 %618
        %vm620 = vcmask 908288
        %v621 = vsel %vm620, %v615, %v617
        %v622 = vsel %vm620, %v617, %v619
        %v625 = vsel %vm459, %v621, 0.0
        %v626 = vsel %vm460, %v622, 0.0
        %627 = vst [vmem:[#allocation3 + $0x40] sm:$0xf] %v625
        %628 = vst [vmem:[#allocation3 + $0x48] sm:$0xf] %v626
        %v629 = vld [vmem:[%s1] sm:$0xff]
        %v630 = vld [vmem:[%s1 + $0x8] sm:$0xff]
        %v631 = vld [vmem:[%s1 + $0x10] sm:$0xff]
        %v632 = vld [vmem:[%s1 + $0x18] sm:$0xff]
        %v633 = vld [vmem:[#allocation3] sm:$0xff]
        %v634 = vld [vmem:[#allocation3 + $0x8] sm:$0xff]
        %v635 = vld [vmem:[#allocation3 + $0x10] sm:$0xff]
        %v636 = vld [vmem:[#allocation3 + $0x18] sm:$0xff]
        %v637 = vld [vmem:[#allocation3 + $0x20] sm:$0xff]
        %v638 = vld [vmem:[#allocation3 + $0x28] sm:$0xff]
        %v639 = vld [vmem:[#allocation3 + $0x30] sm:$0xff]
        %v640 = vld [vmem:[#allocation3 + $0x38] sm:$0xff]
        %v641 = vld [vmem:[#allocation3 + $0x40] sm:$0xf]
        %v642 = vld [vmem:[#allocation3 + $0x48] sm:$0xf]
        %v643 = vld [vmem:[%s2] sm:$0xff]
        %v644 = vld [vmem:[%s2 + $0x8] sm:$0xff]
        %v645 = vld [vmem:[%s2 + $0x10] sm:$0xff]
        %v646 = vld [vmem:[%s2 + $0x18] sm:$0xff]
        %648 = vset.pattern.permute.xlu0 0
        %649 = vperm.xlu0 %648, %v643
        %v650 = vpop.permute.xlu0 %649
        %653 = vset.pattern.permute.xlu0 0
        %654 = vperm.xlu0 %653, %v644
        %v655 = vpop.permute.xlu0 %654
        %657 = vset.pattern.permute.xlu0 0
        %658 = vperm.xlu0 %657, %v645
        %v659 = vpop.permute.xlu0 %658
        %662 = vset.pattern.permute.xlu0 0
        %663 = vperm.xlu0 %662, %v646
        %v664 = vpop.permute.xlu0 %663
        %vm666 = vcmask 293888
        %v668 = vsel %vm666, %v629, 0
        %v671 = vsel %vm666, %v630, 0
        %v674 = vsel %vm666, %v631, 0
        %v677 = vsel %vm666, %v632, 0
        %v680 = vsel %vm381, %v641, 0
        %v683 = vsel %vm381, %v642, 0
        %685 = vmatpush.msra.mxu0 0.0
        %686 = vmatpush.msra.mxu0 0.0
        %687 = vmatpush.msra.mxu0 0.0
        %688 = vmatpush.msra.mxu0 0.0
        %689 = vmatpush.msra.mxu0 0.0
        %690 = vmatpush.msra.mxu0 0.0
        %691 = vmatpush.msra.mxu0 0.0
        %692 = vmatpush.msra.mxu0 0.0
        %693 = vmatpush.msra.mxu0 0.0
        %694 = vmatpush.msra.mxu0 0.0
        %695 = vmatpush.msra.mxu0 0.0
        %696 = vmatpush.msra.mxu0 %v680
        %697 = vmatpush.msra.mxu0 %v639
        %698 = vmatpush.msra.mxu0 %v637
        %699 = vmatpush.msra.mxu0 %v635
        %700 = vmatpush.msra.mxu0 %v633
        %701 = vmatmul.f32.gmra.mxu0 %v668
        %v702 = vpop.f32.mrf.mxu0
        %v703 = vadd.f32 %v650, %v702
        %704 = vmatmul.f32.gmra.mxu0 %v671
        %v705 = vpop.f32.mrf.mxu0
        %706 = vmatmul.f32.gmra.mxu0 %v674
        %v707 = vpop.f32.mrf.mxu0
        %v708 = vadd.f32 %v659, %v707
        %709 = vmatmul.f32.gmra.mxu0 %v677
        %v710 = vpop.f32.mrf.mxu0
        %v711 = vadd.f32 %v664, %v710
        %712 = vdwg.mxu0
        %713 = vmatpush.msra.mxu0 0.0
        %714 = vmatpush.msra.mxu0 0.0
        %715 = vmatpush.msra.mxu0 0.0
        %716 = vmatpush.msra.mxu0 0.0
        %717 = vmatpush.msra.mxu0 0.0
        %718 = vmatpush.msra.mxu0 0.0
        %719 = vmatpush.msra.mxu0 0.0
        %720 = vmatpush.msra.mxu0 0.0
        %721 = vmatpush.msra.mxu0 0.0
        %722 = vmatpush.msra.mxu0 0.0
        %723 = vmatpush.msra.mxu0 0.0
        %724 = vmatpush.msra.mxu0 %v683
        %725 = vmatpush.msra.mxu0 %v640
        %726 = vmatpush.msra.mxu0 %v638
        %727 = vmatpush.msra.mxu0 %v636
        %728 = vmatpush.msra.mxu0 %v634
        %729 = vmatmul.f32.gmra.mxu0 %v668
        %v730 = vpop.f32.mrf.mxu0
        %v731 = vadd.f32 %v650, %v730
        %732 = vmatmul.f32.gmra.mxu0 %v671
        %v733 = vpop.f32.mrf.mxu0
        %734 = vmatmul.f32.gmra.mxu0 %v674
        %v735 = vpop.f32.mrf.mxu0
        %v736 = vadd.f32 %v659, %v735
        %737 = vmatmul.f32.gmra.mxu0 %v677
        %v738 = vpop.f32.mrf.mxu0
        %v739 = vadd.f32 %v664, %v738
        %740 = vdwg.mxu0
        %v741 = vxor.u32 %v703, 2147483648
        %v742 = vxor.u32 %v731, 2147483648
        %v743 = vmul.f32 %v741, 1.442695
        %v744 = vpow.pop %v743
        %v745 = vmul.f32 %v742, 1.442695
        %v746 = vpow.pop %v745
        %v747 = vadd.f32 %v744, 1.0
        %v748 = vadd.f32 %v746, 1.0
        %v749 = vrcp.pop %v747
        %v750 = vmul.f32 %v747, %v749
        %v751 = vsub.f32 1.0, %v750
        %v752 = vmul.f32 %v749, %v751
        %v753 = vadd.f32 %v749, %v752
        %vm754 = vweird.f32 %v747
        %vm755 = vweird.f32 %v749
        %vm756 = vmor %vm754, %vm755
        %v757 = vsel %vm756, %v749, %v753
        %v758 = vand.u32 2147483647, %v747
        %vm759 = vcmp.eq.f32.partialorder %v758, 8.507059e+37
        %v760 = vand.u32 %v747, 2147483648
        %v761 = vor.u32 1.1754944e-38, %v760
        %v762 = vsel %vm759, %v761, %v757
        %v763 = vmul.f32 1.0, %v762
        %v764 = vrcp.pop %v748
        %v765 = vmul.f32 %v748, %v764
        %v766 = vsub.f32 1.0, %v765
        %v767 = vmul.f32 %v764, %v766
        %v768 = vadd.f32 %v764, %v767
        %vm769 = vweird.f32 %v748
        %vm770 = vweird.f32 %v764
        %vm771 = vmor %vm769, %vm770
        %v772 = vsel %vm771, %v764, %v768
        %v773 = vand.u32 2147483647, %v748
        %vm774 = vcmp.eq.f32.partialorder %v773, 8.507059e+37
        %v775 = vand.u32 %v748, 2147483648
        %v776 = vor.u32 1.1754944e-38, %v775
        %v777 = vsel %vm774, %v776, %v772
        %v778 = vmul.f32 1.0, %v777
        %v779 = vxor.u32 %v708, 2147483648
        %v780 = vxor.u32 %v736, 2147483648
        %v781 = vmul.f32 %v779, 1.442695
        %v782 = vpow.pop %v781
        %v783 = vmul.f32 %v780, 1.442695
        %v784 = vpow.pop %v783
        %v785 = vadd.f32 %v782, 1.0
        %v786 = vadd.f32 %v784, 1.0
        %v787 = vrcp.pop %v785
        %v788 = vmul.f32 %v785, %v787
        %v789 = vsub.f32 1.0, %v788
        %v790 = vmul.f32 %v787, %v789
        %v791 = vadd.f32 %v787, %v790
        %vm792 = vweird.f32 %v785
        %vm793 = vweird.f32 %v787
        %vm794 = vmor %vm792, %vm793
        %v795 = vsel %vm794, %v787, %v791
        %v796 = vand.u32 2147483647, %v785
        %vm797 = vcmp.eq.f32.partialorder %v796, 8.507059e+37
        %v798 = vand.u32 %v785, 2147483648
        %v799 = vor.u32 1.1754944e-38, %v798
        %v800 = vsel %vm797, %v799, %v795
        %v801 = vmul.f32 1.0, %v800
        %v802 = vrcp.pop %v786
        %v803 = vmul.f32 %v786, %v802
        %v804 = vsub.f32 1.0, %v803
        %v805 = vmul.f32 %v802, %v804
        %v806 = vadd.f32 %v802, %v805
        %vm807 = vweird.f32 %v786
        %vm808 = vweird.f32 %v802
        %vm809 = vmor %vm807, %vm808
        %v810 = vsel %vm809, %v802, %v806
        %v811 = vand.u32 2147483647, %v786
        %vm812 = vcmp.eq.f32.partialorder %v811, 8.507059e+37
        %v813 = vand.u32 %v786, 2147483648
        %v814 = vor.u32 1.1754944e-38, %v813
        %v815 = vsel %vm812, %v814, %v810
        %v816 = vmul.f32 1.0, %v815
        %v817 = vtanh.pop %v711
        %v818 = vtanh.pop %v739
        %v819 = vmul.f32 %v763, %v817
        %v820 = vmul.f32 %v778, %v818
        %v821 = vtanh.pop %v819
        %v822 = vtanh.pop %v820
        %v823 = vmul.f32 %v801, %v821
        %v824 = vmul.f32 %v816, %v822
        %825 = vst [vmem:[%s330] sm:$0xff] %v823
        %826 = vst [vmem:[%s330 + $0x8] sm:$0xff] %v824
        %827 = vst [vmem:[%s337] sm:$0xff] %v819
        %828 = vst [vmem:[%s337 + $0x8] sm:$0xff] %v820
        %829 = vst [vmem:[#allocation4] sm:$0xff] 0.0
        %830 = vst [vmem:[#allocation4 + $0x8] sm:$0xff] 0.0
        %831 = vst [vmem:[#allocation4 + $0x10] sm:$0xff] 0.0
        %832 = vst.msk [vmem:[#allocation4 + $0x18] sm:$0xff] %vm422, 0.0
        %833 = vst [vmem:[#allocation4 + $0x8] sm:$0xff] %v823
        %834 = vst [vmem:[#allocation4 + $0x10] sm:$0xff] %v824
        %v835 = vld [vmem:[#allocation4] sm:$0xff]
        %v836 = vld [vmem:[#allocation4 + $0x8] sm:$0xff]
        %v837 = vld [vmem:[#allocation4 + $0x10] sm:$0xff]
        %841 = vrot.lane.b32.xlu0 %v835, 17
        %v842 = vpop.permute.xlu0 %841
        %843 = vrot.lane.b32.xlu0 %v836, 17
        %v844 = vpop.permute.xlu0 %843
        %845 = vrot.lane.b32.xlu0 %v837, 17
        %v846 = vpop.permute.xlu0 %845
        %v847 = vsel %vm422, %v842, %v844
        %v848 = vsel %vm422, %v844, %v846
        %v851 = vsel %vm406, %v847, 0.0
        %v852 = vsel %vm407, %v848, 0.0
        %853 = vst [vmem:[#allocation5] sm:$0xff] %v851
        %854 = vst [vmem:[#allocation5 + $0x8] sm:$0xff] %v852
        %v855 = vld [vmem:[#allocation4] sm:$0xff]
        %v856 = vld [vmem:[#allocation4 + $0x8] sm:$0xff]
        %v857 = vld [vmem:[#allocation4 + $0x10] sm:$0xff]
        %861 = vrot.lane.b32.xlu0 %v855, 16
        %v862 = vpop.permute.xlu0 %861
        %863 = vrot.lane.b32.xlu0 %v856, 16
        %v864 = vpop.permute.xlu0 %863
        %865 = vrot.lane.b32.xlu0 %v857, 16
        %v866 = vpop.permute.xlu0 %865
        %v867 = vsel %vm448, %v862, %v864
        %v868 = vsel %vm448, %v864, %v866
        %871 = vst [vmem:[#allocation5 + $0x10] sm:$0xff] %v867
        %872 = vst [vmem:[#allocation5 + $0x18] sm:$0xff] %v868
        %v873 = vld [vmem:[#allocation4] sm:$0xff]
        %v874 = vld [vmem:[#allocation4 + $0x8] sm:$0xff]
        %v875 = vld [vmem:[#allocation4 + $0x10] sm:$0xff]
        %879 = vrot.lane.b32.xlu0 %v873, 15
        %v880 = vpop.permute.xlu0 %879
        %881 = vrot.lane.b32.xlu0 %v874, 15
        %v882 = vpop.permute.xlu0 %881
        %883 = vrot.lane.b32.xlu0 %v875, 15
        %v884 = vpop.permute.xlu0 %883
        %v885 = vsel %vm475, %v880, %v882
        %v886 = vsel %vm475, %v882, %v884
        %v889 = vsel %vm459, %v885, 0.0
        %v890 = vsel %vm460, %v886, 0.0
        %891 = vst [vmem:[#allocation5 + $0x20] sm:$0xff] %v889
        %892 = vst [vmem:[#allocation5 + $0x28] sm:$0xff] %v890
        %v893 = vld [vmem:[#allocation4] sm:$0xff]
        %v894 = vld [vmem:[#allocation4 + $0x8] sm:$0xff]
        %v895 = vld [vmem:[#allocation4 + $0x10] sm:$0xff]
        %899 = vrot.lane.b32.xlu0 %v893, 1
        %v900 = vpop.permute.xlu0 %899
        %901 = vrot.lane.b32.xlu0 %v894, 1
        %v902 = vpop.permute.xlu0 %901
        %903 = vrot.lane.b32.xlu0 %v895, 1
        %v904 = vpop.permute.xlu0 %903
        %v905 = vsel %vm500, %v900, %v902
        %v906 = vsel %vm500, %v902, %v904
        %v909 = vsel %vm406, %v905, 0.0
        %v910 = vsel %vm407, %v906, 0.0
        %911 = vst [vmem:[#allocation5 + $0x30] sm:$0xff] %v909
        %912 = vst [vmem:[#allocation5 + $0x38] sm:$0xff] %v910
        %v913 = vld [vmem:[#allocation4 + $0x8] sm:$0xff]
        %v914 = vld [vmem:[#allocation4 + $0x10] sm:$0xff]
        %915 = vst [vmem:[#allocation5 + $0x40] sm:$0xff] %v913
        %916 = vst [vmem:[#allocation5 + $0x48] sm:$0xff] %v914
        %v917 = vld [vmem:[#allocation4 + $0x8] sm:$0xff]
        %v918 = vld [vmem:[#allocation4 + $0x10] sm:$0xff]
        %v919 = vld [vmem:[#allocation4 + $0x18] sm:$0xff]
        %923 = vrot.lane.b32.xlu0 %v917, 127
        %v924 = vpop.permute.xlu0 %923
        %925 = vrot.lane.b32.xlu0 %v918, 127
        %v926 = vpop.permute.xlu0 %925
        %927 = vrot.lane.b32.xlu0 %v919, 127
        %v928 = vpop.permute.xlu0 %927
        %v929 = vsel %vm540, %v924, %v926
        %v930 = vsel %vm540, %v926, %v928
        %v933 = vsel %vm459, %v929, 0.0
        %v934 = vsel %vm460, %v930, 0.0
        %935 = vst [vmem:[#allocation5 + $0x50] sm:$0xff] %v933
        %936 = vst [vmem:[#allocation5 + $0x58] sm:$0xff] %v934
        %v937 = vld [vmem:[#allocation4 + $0x8] sm:$0xff]
        %v938 = vld [vmem:[#allocation4 + $0x10] sm:$0xff]
        %v939 = vld [vmem:[#allocation4 + $0x18] sm:$0xff]
        %943 = vrot.lane.b32.xlu0 %v937, 113
        %v944 = vpop.permute.xlu0 %943
        %945 = vrot.lane.b32.xlu0 %v938, 113
        %v946 = vpop.permute.xlu0 %945
        %947 = vrot.lane.b32.xlu0 %v939, 113
        %v948 = vpop.permute.xlu0 %947
        %v949 = vsel %vm571, %v944, %v946
        %v950 = vsel %vm571, %v946, %v948
        %v953 = vsel %vm406, %v949, 0.0
        %v954 = vsel %vm407, %v950, 0.0
        %955 = vst [vmem:[#allocation5 + $0x60] sm:$0xff] %v953
        %956 = vst [vmem:[#allocation5 + $0x68] sm:$0xff] %v954
        %v957 = vld [vmem:[#allocation4 + $0x8] sm:$0xff]
        %v958 = vld [vmem:[#allocation4 + $0x10] sm:$0xff]
        %v959 = vld [vmem:[#allocation4 + $0x18] sm:$0xff]
        %963 = vrot.lane.b32.xlu0 %v957, 112
        %v964 = vpop.permute.xlu0 %963
        %965 = vrot.lane.b32.xlu0 %v958, 112
        %v966 = vpop.permute.xlu0 %965
        %967 = vrot.lane.b32.xlu0 %v959, 112
        %v968 = vpop.permute.xlu0 %967
        %v969 = vsel %vm597, %v964, %v966
        %v970 = vsel %vm597, %v966, %v968
        %973 = vst [vmem:[#allocation5 + $0x70] sm:$0xff] %v969
        %974 = vst [vmem:[#allocation5 + $0x78] sm:$0xff] %v970
        %v975 = vld [vmem:[#allocation4 + $0x8] sm:$0xff]
        %v976 = vld [vmem:[#allocation4 + $0x10] sm:$0xff]
        %v977 = vld [vmem:[#allocation4 + $0x18] sm:$0xff]
        %981 = vrot.lane.b32.xlu0 %v975, 111
        %v982 = vpop.permute.xlu0 %981
        %983 = vrot.lane.b32.xlu0 %v976, 111
        %v984 = vpop.permute.xlu0 %983
        %985 = vrot.lane.b32.xlu0 %v977, 111
        %v986 = vpop.permute.xlu0 %985
        %v987 = vsel %vm620, %v982, %v984
        %v988 = vsel %vm620, %v984, %v986
        %v991 = vsel %vm459, %v987, 0.0
        %v992 = vsel %vm460, %v988, 0.0
        %993 = vst [vmem:[#allocation5 + $0x80] sm:$0xff] %v991
        %994 = vst [vmem:[#allocation5 + $0x88] sm:$0xff] %v992
        %v995 = vld [vmem:[%s3] sm:$0xff]
        %v996 = vld [vmem:[%s3 + $0x8] sm:$0xff]
        %v997 = vld [vmem:[%s3 + $0x10] sm:$0xff]
        %v998 = vld [vmem:[%s3 + $0x18] sm:$0xff]
        %v999 = vld [vmem:[#allocation5] sm:$0xff]
        %v1000 = vld [vmem:[#allocation5 + $0x8] sm:$0xff]
        %v1001 = vld [vmem:[#allocation5 + $0x10] sm:$0xff]
        %v1002 = vld [vmem:[#allocation5 + $0x18] sm:$0xff]
        %v1003 = vld [vmem:[#allocation5 + $0x20] sm:$0xff]
        %v1004 = vld [vmem:[#allocation5 + $0x28] sm:$0xff]
        %v1005 = vld [vmem:[#allocation5 + $0x30] sm:$0xff]
        %v1006 = vld [vmem:[#allocation5 + $0x38] sm:$0xff]
        %v1007 = vld [vmem:[#allocation5 + $0x40] sm:$0xff]
        %v1008 = vld [vmem:[#allocation5 + $0x48] sm:$0xff]
        %v1009 = vld [vmem:[#allocation5 + $0x50] sm:$0xff]
        %v1010 = vld [vmem:[#allocation5 + $0x58] sm:$0xff]
        %v1011 = vld [vmem:[#allocation5 + $0x60] sm:$0xff]
        %v1012 = vld [vmem:[#allocation5 + $0x68] sm:$0xff]
        %v1013 = vld [vmem:[#allocation5 + $0x70] sm:$0xff]
        %v1014 = vld [vmem:[#allocation5 + $0x78] sm:$0xff]
        %v1015 = vld [vmem:[#allocation5 + $0x80] sm:$0xff]
        %v1016 = vld [vmem:[#allocation5 + $0x88] sm:$0xff]
        %v1017 = vld [vmem:[%s4] sm:$0xff]
        %v1018 = vld [vmem:[%s4 + $0x8] sm:$0xff]
        %v1019 = vld [vmem:[%s4 + $0x10] sm:$0xff]
        %v1020 = vld [vmem:[%s4 + $0x18] sm:$0xff]
        %1022 = vset.pattern.permute.xlu0 0
        %1023 = vperm.xlu0 %1022, %v1017
        %v1024 = vpop.permute.xlu0 %1023
        %1027 = vset.pattern.permute.xlu0 0
        %1028 = vperm.xlu0 %1027, %v1018
        %v1029 = vpop.permute.xlu0 %1028
        %1031 = vset.pattern.permute.xlu0 0
        %1032 = vperm.xlu0 %1031, %v1019
        %v1033 = vpop.permute.xlu0 %1032
        %1036 = vset.pattern.permute.xlu0 0
        %1037 = vperm.xlu0 %1036, %v1020
        %v1038 = vpop.permute.xlu0 %1037
        %vm1040 = vcmask 588800
        %v1042 = vsel %vm1040, %v995, 0
        %v1045 = vsel %vm1040, %v996, 0
        %v1048 = vsel %vm1040, %v997, 0
        %v1051 = vsel %vm1040, %v998, 0
        %1053 = vmatpush.msra.mxu0 0.0
        %1054 = vmatpush.msra.mxu0 0.0
        %1055 = vmatpush.msra.mxu0 0.0
        %1056 = vmatpush.msra.mxu0 0.0
        %1057 = vmatpush.msra.mxu0 0.0
        %1058 = vmatpush.msra.mxu0 0.0
        %1059 = vmatpush.msra.mxu0 0.0
        %1060 = vmatpush.msra.mxu0 %v1015
        %1061 = vmatpush.msra.mxu0 %v1013
        %1062 = vmatpush.msra.mxu0 %v1011
        %1063 = vmatpush.msra.mxu0 %v1009
        %1064 = vmatpush.msra.mxu0 %v1007
        %1065 = vmatpush.msra.mxu0 %v1005
        %1066 = vmatpush.msra.mxu0 %v1003
        %1067 = vmatpush.msra.mxu0 %v1001
        %1068 = vmatpush.msra.mxu0 %v999
        %1069 = vmatmul.f32.gmra.mxu0 %v1042
        %v1070 = vpop.f32.mrf.mxu0
        %v1071 = vadd.f32 %v1024, %v1070
        %1072 = vmatmul.f32.gmra.mxu0 %v1045
        %v1073 = vpop.f32.mrf.mxu0
        %1074 = vmatmul.f32.gmra.mxu0 %v1048
        %v1075 = vpop.f32.mrf.mxu0
        %v1076 = vadd.f32 %v1033, %v1075
        %1077 = vmatmul.f32.gmra.mxu0 %v1051
        %v1078 = vpop.f32.mrf.mxu0
        %v1079 = vadd.f32 %v1038, %v1078
        %1080 = vdwg.mxu0
        %1081 = vmatpush.msra.mxu0 0.0
        %1082 = vmatpush.msra.mxu0 0.0
        %1083 = vmatpush.msra.mxu0 0.0
        %1084 = vmatpush.msra.mxu0 0.0
        %1085 = vmatpush.msra.mxu0 0.0
        %1086 = vmatpush.msra.mxu0 0.0
        %1087 = vmatpush.msra.mxu0 0.0
        %1088 = vmatpush.msra.mxu0 %v1016
        %1089 = vmatpush.msra.mxu0 %v1014
        %1090 = vmatpush.msra.mxu0 %v1012
        %1091 = vmatpush.msra.mxu0 %v1010
        %1092 = vmatpush.msra.mxu0 %v1008
        %1093 = vmatpush.msra.mxu0 %v1006
        %1094 = vmatpush.msra.mxu0 %v1004
        %1095 = vmatpush.msra.mxu0 %v1002
        %1096 = vmatpush.msra.mxu0 %v1000
        %1097 = vmatmul.f32.gmra.mxu0 %v1042
        %v1098 = vpop.f32.mrf.mxu0
        %v1099 = vadd.f32 %v1024, %v1098
        %1100 = vmatmul.f32.gmra.mxu0 %v1045
        %v1101 = vpop.f32.mrf.mxu0
        %1102 = vmatmul.f32.gmra.mxu0 %v1048
        %v1103 = vpop.f32.mrf.mxu0
        %v1104 = vadd.f32 %v1033, %v1103
        %1105 = vmatmul.f32.gmra.mxu0 %v1051
        %v1106 = vpop.f32.mrf.mxu0
        %v1107 = vadd.f32 %v1038, %v1106
        %1108 = vdwg.mxu0
        %v1109 = vxor.u32 %v1071, 2147483648
        %v1110 = vxor.u32 %v1099, 2147483648
        %v1111 = vmul.f32 %v1109, 1.442695
        %v1112 = vpow.pop %v1111
        %v1113 = vmul.f32 %v1110, 1.442695
        %v1114 = vpow.pop %v1113
        %v1115 = vadd.f32 %v1112, 1.0
        %v1116 = vadd.f32 %v1114, 1.0
        %v1117 = vrcp.pop %v1115
        %v1118 = vmul.f32 %v1115, %v1117
        %v1119 = vsub.f32 1.0, %v1118
        %v1120 = vmul.f32 %v1117, %v1119
        %v1121 = vadd.f32 %v1117, %v1120
        %vm1122 = vweird.f32 %v1115
        %vm1123 = vweird.f32 %v1117
        %vm1124 = vmor %vm1122, %vm1123
        %v1125 = vsel %vm1124, %v1117, %v1121
        %v1126 = vand.u32 2147483647, %v1115
        %vm1127 = vcmp.eq.f32.partialorder %v1126, 8.507059e+37
        %v1128 = vand.u32 %v1115, 2147483648
        %v1129 = vor.u32 1.1754944e-38, %v1128
        %v1130 = vsel %vm1127, %v1129, %v1125
        %v1131 = vmul.f32 1.0, %v1130
        %v1132 = vrcp.pop %v1116
        %v1133 = vmul.f32 %v1116, %v1132
        %v1134 = vsub.f32 1.0, %v1133
        %v1135 = vmul.f32 %v1132, %v1134
        %v1136 = vadd.f32 %v1132, %v1135
        %vm1137 = vweird.f32 %v1116
        %vm1138 = vweird.f32 %v1132
        %vm1139 = vmor %vm1137, %vm1138
        %v1140 = vsel %vm1139, %v1132, %v1136
        %v1141 = vand.u32 2147483647, %v1116
        %vm1142 = vcmp.eq.f32.partialorder %v1141, 8.507059e+37
        %v1143 = vand.u32 %v1116, 2147483648
        %v1144 = vor.u32 1.1754944e-38, %v1143
        %v1145 = vsel %vm1142, %v1144, %v1140
        %v1146 = vmul.f32 1.0, %v1145
        %v1147 = vxor.u32 %v1076, 2147483648
        %v1148 = vxor.u32 %v1104, 2147483648
        %v1149 = vmul.f32 %v1147, 1.442695
        %v1150 = vpow.pop %v1149
        %v1151 = vmul.f32 %v1148, 1.442695
        %v1152 = vpow.pop %v1151
        %v1153 = vadd.f32 %v1150, 1.0
        %v1154 = vadd.f32 %v1152, 1.0
        %v1155 = vrcp.pop %v1153
        %v1156 = vmul.f32 %v1153, %v1155
        %v1157 = vsub.f32 1.0, %v1156
        %v1158 = vmul.f32 %v1155, %v1157
        %v1159 = vadd.f32 %v1155, %v1158
        %vm1160 = vweird.f32 %v1153
        %vm1161 = vweird.f32 %v1155
        %vm1162 = vmor %vm1160, %vm1161
        %v1163 = vsel %vm1162, %v1155, %v1159
        %v1164 = vand.u32 2147483647, %v1153
        %vm1165 = vcmp.eq.f32.partialorder %v1164, 8.507059e+37
        %v1166 = vand.u32 %v1153, 2147483648
        %v1167 = vor.u32 1.1754944e-38, %v1166
        %v1168 = vsel %vm1165, %v1167, %v1163
        %v1169 = vmul.f32 1.0, %v1168
        %v1170 = vrcp.pop %v1154
        %v1171 = vmul.f32 %v1154, %v1170
        %v1172 = vsub.f32 1.0, %v1171
        %v1173 = vmul.f32 %v1170, %v1172
        %v1174 = vadd.f32 %v1170, %v1173
        %vm1175 = vweird.f32 %v1154
        %vm1176 = vweird.f32 %v1170
        %vm1177 = vmor %vm1175, %vm1176
        %v1178 = vsel %vm1177, %v1170, %v1174
        %v1179 = vand.u32 2147483647, %v1154
        %vm1180 = vcmp.eq.f32.partialorder %v1179, 8.507059e+37
        %v1181 = vand.u32 %v1154, 2147483648
        %v1182 = vor.u32 1.1754944e-38, %v1181
        %v1183 = vsel %vm1180, %v1182, %v1178
        %v1184 = vmul.f32 1.0, %v1183
        %v1185 = vtanh.pop %v1079
        %v1186 = vtanh.pop %v1107
        %v1187 = vmul.f32 %v1131, %v1185
        %v1188 = vmul.f32 %v1146, %v1186
        %v1189 = vtanh.pop %v1187
        %v1190 = vtanh.pop %v1188
        %v1191 = vmul.f32 %v1169, %v1189
        %v1192 = vmul.f32 %v1184, %v1190
        %1193 = vst [vmem:[%s344] sm:$0xff] %v1191
        %1194 = vst [vmem:[%s344 + $0x8] sm:$0xff] %v1192
        %1195 = vst [vmem:[%s351] sm:$0xff] %v1187
        %1196 = vst [vmem:[%s351 + $0x8] sm:$0xff] %v1188
        %s1197 = sand.u32 %s150, 1
        %s1198 = scalar_lea.sflag [#allocation8], %s1197
        %s1199 = sand.u32 %s150, 1
        %s1200 = smul.addr %s1199, 16
        %s1201 = scalar_lea.vmem [#allocation9], %s1200
        %s1202 = sand.u32 %s32, 1
        %s1203 = scalar_lea.sflag [#allocation11], %s1202
        %s1204 = sand.u32 %s176, 1
        %s1205 = smul.addr %s1204, 16
        %s1206 = scalar_lea.vmem [#allocation10], %s1205
        %s1207 = sand.u32 %s32, 1
        %s1208 = scalar_lea.sflag [#allocation11], %s1207
        %s1209 = sand.u32 %s202, 1
        %s1210 = smul.addr %s1209, 16
        %s1211 = scalar_lea.vmem [#allocation12], %s1210
        %s1212 = sand.u32 %s228, 1
        %s1213 = scalar_lea.sflag [#allocation14], %s1212
        %s1214 = sand.u32 %s228, 1
        %s1215 = smul.addr %s1214, 16
        %s1216 = scalar_lea.vmem [#allocation13], %s1215
        // Predicated region
        $region45: #{tpu_custom_call.1} parent=39 // pred_check
          %p1217 = pneg %p160
        $region46: #{tpu_custom_call.1} parent=39 // pred_check_branch
          %1219 = sbr.rel (%p1217) target = $region48
        $region47: #{tpu_custom_call.1} parent=39 // pred_region
          %1221 = vsyncadd %s1198, 0
          %s1222 = smul.addr %s32, 2
          %s1223 = smul.addr %s1222, 8
          %s1224 = scalar_lea.hbm %s5, %s1223
          %s1226 = sshll.u32 %s1201, 4
          %s1227 = int_to_ptr.vmem [resolvable:$true] %s1226
          %s1228 = sshll.u32 %s1224, 4
          %s1229 = int_to_ptr.hbm [resolvable:$true] %s1228
          %1231 = dma.vmem_to_hbm [thread:$0]  %s1227, 256, %s1229, %s1198
        $region48: #{tpu_custom_call.1} parent=39 // pred_fallthru
          _
        // Predicated region
        $region49: #{tpu_custom_call.1} parent=39 // pred_check
          %p1232 = pneg %p186
        $region50: #{tpu_custom_call.1} parent=39 // pred_check_branch
          %1234 = sbr.rel (%p1232) target = $region52
        $region51: #{tpu_custom_call.1} parent=39 // pred_region
          %1236 = vsyncadd %s1203, 0
          %s1237 = smul.addr %s32, 2
          %s1238 = smul.addr %s1237, 8
          %s1239 = scalar_lea.hbm %s6, %s1238
          %s1241 = sshll.u32 %s1206, 4
          %s1242 = int_to_ptr.vmem [resolvable:$true] %s1241
          %s1243 = sshll.u32 %s1239, 4
          %s1244 = int_to_ptr.hbm [resolvable:$true] %s1243
          %1246 = dma.vmem_to_hbm [thread:$0]  %s1242, 256, %s1244, %s1203
        $region52: #{tpu_custom_call.1} parent=39 // pred_fallthru
          _
        // Predicated region
        $region53: #{tpu_custom_call.1} parent=39 // pred_check
          %p1247 = pneg %p212
        $region54: #{tpu_custom_call.1} parent=39 // pred_check_branch
          %1249 = sbr.rel (%p1247) target = $region56
        $region55: #{tpu_custom_call.1} parent=39 // pred_region
          %1251 = vsyncadd %s1208, 0
          %s1252 = smul.addr %s32, 2
          %s1253 = smul.addr %s1252, 8
          %s1254 = scalar_lea.hbm %s7, %s1253
          %s1256 = sshll.u32 %s1211, 4
          %s1257 = int_to_ptr.vmem [resolvable:$true] %s1256
          %s1258 = sshll.u32 %s1254, 4
          %s1259 = int_to_ptr.hbm [resolvable:$true] %s1258
          %1261 = dma.vmem_to_hbm [thread:$0]  %s1257, 256, %s1259, %s1208
        $region56: #{tpu_custom_call.1} parent=39 // pred_fallthru
          _
        // Predicated region
        $region57: #{tpu_custom_call.1} parent=39 // pred_check
          %p1262 = pneg %p238
        $region58: #{tpu_custom_call.1} parent=39 // pred_check_branch
          %1264 = sbr.rel (%p1262) target = $region60
        $region59: #{tpu_custom_call.1} parent=39 // pred_region
          %1266 = vsyncadd %s1213, 0
          %s1267 = smul.addr %s32, 2
          %s1268 = smul.addr %s1267, 8
          %s1269 = scalar_lea.hbm %s8, %s1268
          %s1271 = sshll.u32 %s1216, 4
          %s1272 = int_to_ptr.vmem [resolvable:$true] %s1271
          %s1273 = sshll.u32 %s1269, 4
          %s1274 = int_to_ptr.hbm [resolvable:$true] %s1273
          %1276 = dma.vmem_to_hbm [thread:$0]  %s1272, 256, %s1274, %s1213
        $region60: #{tpu_custom_call.1} parent=39 // pred_fallthru
          _
      $region40: #{tpu_custom_call.1} parent=5 // pred_fallthru
        _
      %p1277 = scmp.le.s32.totalorder 2, %s27
      // Predicated region
      $region61: #{tpu_custom_call.1} parent=5 // pred_check
        %p1278 = pneg %p1277
      $region62: #{tpu_custom_call.1} parent=5 // pred_check_branch
        %1280 = sbr.rel (%p1278) target = $region64
      $region63: #{tpu_custom_call.1} parent=5 // pred_region
        %s1281 = ssub.s32 %s27, 2
        // Predicated region
        $region65: #{tpu_custom_call.1} parent=63 // pred_check
          %p1282 = pneg %p166
        $region66: #{tpu_custom_call.1} parent=63 // pred_check_branch
          %1284 = sbr.rel (%p1282) target = $region68
        $region67: #{tpu_custom_call.1} parent=63 // pred_region
          %s1285 = sand.u32 %s151, 1
          %s1286 = scalar_lea.sflag [#allocation8], %s1285
          %s1287 = sand.u32 %s151, 1
          %s1288 = smul.addr %s1287, 16
          %s1289 = scalar_lea.vmem [#allocation9], %s1288
          %1291 = dma.done %s1286, 256
        $region68: #{tpu_custom_call.1} parent=63 // pred_fallthru
          _
        // Predicated region
        $region69: #{tpu_custom_call.1} parent=63 // pred_check
          %p1292 = pneg %p192
        $region70: #{tpu_custom_call.1} parent=63 // pred_check_branch
          %1294 = sbr.rel (%p1292) target = $region72
        $region71: #{tpu_custom_call.1} parent=63 // pred_region
          %s1295 = sand.u32 %s33, 1
          %s1296 = scalar_lea.sflag [#allocation11], %s1295
          %s1297 = sand.u32 %s177, 1
          %s1298 = smul.addr %s1297, 16
          %s1299 = scalar_lea.vmem [#allocation10], %s1298
          %1301 = dma.done %s1296, 256
        $region72: #{tpu_custom_call.1} parent=63 // pred_fallthru
          _
        // Predicated region
        $region73: #{tpu_custom_call.1} parent=63 // pred_check
          %p1302 = pneg %p218
        $region74: #{tpu_custom_call.1} parent=63 // pred_check_branch
          %1304 = sbr.rel (%p1302) target = $region76
        $region75: #{tpu_custom_call.1} parent=63 // pred_region
          %s1305 = sand.u32 %s33, 1
          %s1306 = scalar_lea.sflag [#allocation11], %s1305
          %s1307 = sand.u32 %s203, 1
          %s1308 = smul.addr %s1307, 16
          %s1309 = scalar_lea.vmem [#allocation12], %s1308
          %1311 = dma.done %s1306, 256
        $region76: #{tpu_custom_call.1} parent=63 // pred_fallthru
          _
        // Predicated region
        $region77: #{tpu_custom_call.1} parent=63 // pred_check
          %p1312 = pneg %p244
        $region78: #{tpu_custom_call.1} parent=63 // pred_check_branch
          %1314 = sbr.rel (%p1312) target = $region80
        $region79: #{tpu_custom_call.1} parent=63 // pred_region
          %s1315 = sand.u32 %s229, 1
          %s1316 = scalar_lea.sflag [#allocation14], %s1315
          %s1317 = sand.u32 %s229, 1
          %s1318 = smul.addr %s1317, 16
          %s1319 = scalar_lea.vmem [#allocation13], %s1318
          %1321 = dma.done %s1316, 256
        $region80: #{tpu_custom_call.1} parent=63 // pred_fallthru
          _
      $region64: #{tpu_custom_call.1} parent=5 // pred_fallthru
        _
    $region6: #{tpu_custom_call.1} parent=1 // loop_footer
      %s31 = sadd.s32 1, %s27
    $region7: #{tpu_custom_call.1} parent=1 // loop_footer_branch
      %26 = sbr.rel target = $region3
    $region8: #{tpu_custom_call.1} parent=1 // loop_exit
      _
    %1322 = vsyncpa [#allocation7], 1
    %s1323 = scalar_lea.sflag [#allocation7], 1
    %1324 = vsyncpa %s1323, 1
    %1325 = vsyncpa [#allocation8], 1
    %s1326 = scalar_lea.sflag [#allocation8], 1
    %1327 = vsyncpa %s1326, 1
    %1328 = vsyncpa [#allocation11], 1
    %s1329 = scalar_lea.sflag [#allocation11], 1
    %1330 = vsyncpa %s1329, 1
    %1331 = vsyncpa [#allocation14], 1
    %s1332 = scalar_lea.sflag [#allocation14], 1
    %1333 = vsyncpa %s1332, 1

</llo_original>
